<compile_context>
chip_gen: v7x
topology: tpu7x:2x2x1
jax: 0.10.0
libtpu: 0.0.40
codegen_flags: <defaults>
</compile_context>

<pallas_src>
import functools

import jax
import jax.numpy as jnp
from jax.experimental import pallas as pl
from jax.experimental.pallas import tpu as pltpu


def _lstm_kernel(x_ref, wih_ref, whh_ref, b_ref, wout_ref, bout_ref,
                 out_ref, gx_ref, hall_ref, state_ref,
                 *, tc, hp, unroll):
    """One (batch-shard, time-chunk) grid step of the LSTM.

    x_ref    : (Tc, Bs, I)    input chunk (compute dtype)
    wih_ref  : (I, 4Hp)       W_ih^T, gate-reordered (i,f,o,g), lane-padded
    whh_ref  : (Hp, 4Hp)      W_hh^T, gate-reordered, lane-padded
    b_ref    : (1, 4Hp)       b_ih + b_hh, gate-reordered, lane-padded (f32)
    wout_ref : (Hp, Op)       hidden2out weight^T, lane-padded
    bout_ref : (1, Op)        hidden2out bias, lane-padded (f32)
    out_ref  : (Tc, Bs, Op)   projected outputs for this chunk (f32)
    gx_ref   : (Tc, Bs, 4Hp)  scratch: input-side gate pre-activations (f32)
    hall_ref : (Tc, Bs, Hp)   scratch: hidden states of this chunk (f32)
    state_ref: (2, Bs, Hp)    scratch: (h, c) carry across time chunks (f32)
    """
    t_chunk = pl.program_id(1)

    @pl.when(t_chunk == 0)
    def _():  # fresh (h, c) at the start of each sequence / batch shard
        state_ref[...] = jnp.zeros_like(state_ref)

    bs = x_ref.shape[1]
    in_dim = x_ref.shape[2]
    op = out_ref.shape[2]
    cdt = wih_ref.dtype            # matmul operand dtype (f32 or bf16)

    # ---- Phase 1: input projection for the whole chunk as ONE matmul -------
    # (off the serial path; f32 accumulation regardless of operand dtype)
    x_flat = x_ref[...].reshape(tc * bs, in_dim)
    gx = jnp.dot(x_flat, wih_ref[...],
                 preferred_element_type=jnp.float32) + b_ref[...]
    gx_ref[...] = gx.reshape(tc, bs, 4 * hp)

    # ---- Phase 2: sequential recurrence ------------------------------------
    # Only h_prev @ W_hh^T + the elementwise state update sit on the serial
    # critical path.
    whh = whh_ref[...]
    # TODO(synk): pltpu.matmul_push_rhs/acc_lhs/pop would keep W_hh resident in
    # the MXU across the whole loop instead of re-pushing it every step.

    def step(t, carry):
        h_prev, c_prev = carry
        gates = gx_ref[t] + jnp.dot(h_prev.astype(cdt), whh,
                                    preferred_element_type=jnp.float32)
        # Gate columns were reordered in the wrapper to (i, f, o, g): one
        # contiguous, lane-aligned sigmoid over 3*Hp and one tanh over the
        # trailing Hp slice (all slices fall on 128-lane boundaries).
        sig = jax.nn.sigmoid(gates[:, 0:3 * hp])
        i_g = sig[:, 0 * hp:1 * hp]
        f_g = sig[:, 1 * hp:2 * hp]
        o_g = sig[:, 2 * hp:3 * hp]
        g_g = jnp.tanh(gates[:, 3 * hp:4 * hp])
        c_new = f_g * c_prev + i_g * g_g
        h_new = o_g * jnp.tanh(c_new)
        hall_ref[t] = h_new
        return h_new, c_new

    h_last, c_last = jax.lax.fori_loop(
        0, tc, step, (state_ref[0], state_ref[1]), unroll=unroll)
    state_ref[0] = h_last
    state_ref[1] = c_last

    # ---- Phase 3: deferred hidden2out projection as ONE matmul -------------
    h_flat = hall_ref[...].reshape(tc * bs, hp).astype(cdt)
    out = jnp.dot(h_flat, wout_ref[...],
                  preferred_element_type=jnp.float32) + bout_ref[...]
    out_ref[...] = out.reshape(tc, bs, op)


def _round_up(v, m):
    return ((v + m - 1) // m) * m


_GATE_ORDER = (0, 1, 3, 2)   # PyTorch (i, f, g, o) -> kernel (i, f, o, g)


def _pack_gate_cols(w, H, Hp, dtype):
    """(4H, X) PyTorch gate-stacked weight -> (X, 4Hp): transposed, gates
    reordered to (i,f,o,g), each gate's H real columns placed at the start of a
    128-aligned Hp-wide slot (padded columns zero)."""
    X = w.shape[1]
    out = jnp.zeros((X, 4 * Hp), dtype)
    for slot, g in enumerate(_GATE_ORDER):
        out = out.at[:, slot * Hp: slot * Hp + H].set(
            w[g * H:(g + 1) * H, :].T.astype(dtype))
    return out


def _pack_gate_bias(b, H, Hp):
    out = jnp.zeros((1, 4 * Hp), jnp.float32)
    for slot, g in enumerate(_GATE_ORDER):
        out = out.at[0, slot * Hp: slot * Hp + H].set(
            b[g * H:(g + 1) * H].astype(jnp.float32))
    return out


def lstm_forward(x, w_ih, w_hh, b_ih, b_hh, w_out, b_out, *,
                 compute_dtype=jnp.float32, time_chunk=None, batch_shards=1):
    """x: (T, B, I) -> (T, B, O). Matches torch nn.LSTM(1 layer) + Linear.

    compute_dtype: dtype of the matmul operands (weights / x / h).  bf16 halves
        weight VMEM and doubles MXU throughput on v6e/v7x; accumulation and the
        (h, c) state always stay f32.
    time_chunk:    timesteps per grid step (auto-sized for VMEM if None).
    batch_shards:  leading "parallel" grid axis over the padded batch (set 2 on
        v7x to use both TensorCores; each shard keeps >= 8 batch rows).
    """
    T, B, I = x.shape
    H = w_hh.shape[1]            # w_hh: (4H, H)
    O = w_out.shape[0]           # w_out: (O, H)

    # Lane/sublane padding: batch to 8 sublanes, hidden & output to 128 lanes.
    Hp = _round_up(H, 128)
    Op = _round_up(O, 128)
    Bp = _round_up(B, 8)
    if batch_shards > 1:
        Bp = _round_up(Bp, 8 * batch_shards)
    Bs = Bp // batch_shards

    # Time chunking: bound the per-chunk VMEM working set independently of T.
    if time_chunk is None:
        per_t = Bs * (2 * I + 4 * Hp + Hp + 2 * Op) * 4
        time_chunk = max(1, (8 << 20) // max(per_t, 1))
    Tc = max(1, min(int(time_chunk), T))
    Tp = _round_up(T, Tc)
    n_t = Tp // Tc

    # Pad input (padded time steps come after all real ones; padded batch rows
    # are independent) and cast matmul operands.
    x = jnp.pad(x, ((0, Tp - T), (0, Bp - B), (0, 0))).astype(compute_dtype)

    wih_t = _pack_gate_cols(w_ih, H, Hp, compute_dtype)                # (I, 4Hp)
    whh_t = jnp.pad(_pack_gate_cols(w_hh, H, Hp, compute_dtype),
                    ((0, Hp - H), (0, 0)))                             # (Hp, 4Hp)
    bias = _pack_gate_bias(b_ih + b_hh, H, Hp)                         # (1, 4Hp)
    wout_t = jnp.zeros((Hp, Op), compute_dtype).at[:H, :O].set(
        w_out.T.astype(compute_dtype))                                 # (Hp, Op)
    bout = jnp.zeros((1, Op), jnp.float32).at[0, :O].set(
        b_out.astype(jnp.float32))                                     # (1, Op)

    kernel = functools.partial(_lstm_kernel, tc=Tc, hp=Hp,
                               unroll=min(Tc, 8))   # partial unroll at large Tc

    # Explicit VMEM limit sized from the chunk working set (weights are
    # double-buffered by Pallas' default pipelining; x/out chunks x2).
    wbytes = jnp.dtype(compute_dtype).itemsize
    est = (2 * ((I * 4 * Hp + Hp * 4 * Hp + Hp * Op) * wbytes
                + (4 * Hp + Op) * 4)
           + 2 * Tc * Bs * (I * wbytes + Op * 4)
           + (Tc * Bs * 4 * Hp + Tc * Bs * Hp + 2 * Bs * Hp) * 4)
    vmem_limit = int(min(max(est * 3 // 2, 32 << 20), 100 << 20))
    # TODO(synk): on v7x (64 MiB VMEM) shrink time_chunk if est exceeds ~48 MiB.

    out = pl.pallas_call(
        kernel,
        out_shape=jax.ShapeDtypeStruct((Tp, Bp, Op), jnp.float32),
        grid_spec=pltpu.PrefetchScalarGridSpec(
            num_scalar_prefetch=0,
            grid=(batch_shards, n_t),
            in_specs=[
                pl.BlockSpec((Tc, Bs, I), lambda b, t: (t, b, 0)),
                # Weights/bias: constant block index -> DMA'd once, resident.
                # TODO(synk): pipeline_mode=pl.Buffered(1) would drop their
                # unused second pipeline buffer and free VMEM for a larger Tc.
                pl.BlockSpec((I, 4 * Hp), lambda b, t: (0, 0)),
                pl.BlockSpec((Hp, 4 * Hp), lambda b, t: (0, 0)),
                pl.BlockSpec((1, 4 * Hp), lambda b, t: (0, 0)),
                pl.BlockSpec((Hp, Op), lambda b, t: (0, 0)),
                pl.BlockSpec((1, Op), lambda b, t: (0, 0)),
            ],
            out_specs=pl.BlockSpec((Tc, Bs, Op), lambda b, t: (t, b, 0)),
            scratch_shapes=[
                pltpu.VMEM((Tc, Bs, 4 * Hp), jnp.float32),   # x-side gate pre-acts
                pltpu.VMEM((Tc, Bs, Hp), jnp.float32),       # chunk hidden states
                pltpu.VMEM((2, Bs, Hp), jnp.float32),        # (h, c) carry
            ],
        ),
        compiler_params=pltpu.CompilerParams(
            # batch shards are independent (megacore); the time axis is the
            # serial recurrence and must NEVER be "parallel".
            dimension_semantics=("parallel", "arbitrary"),
            vmem_limit_bytes=vmem_limit,
        ),
    )(x, wih_t, whh_t, bias, wout_t, bout)

    return out[:T, :B, :O]


def _reference(x, w_ih, w_hh, b_ih, b_hh, w_out, b_out):
    """Pure-JAX reference mirroring PyTorch semantics, for sanity checking."""
    T, B, I = x.shape
    H = w_hh.shape[1]

    def step(carry, x_t):
        h, c = carry
        gates = x_t @ w_ih.T + b_ih + h @ w_hh.T + b_hh
        i = jax.nn.sigmoid(gates[:, 0 * H:1 * H])
        f = jax.nn.sigmoid(gates[:, 1 * H:2 * H])
        g = jnp.tanh(gates[:, 2 * H:3 * H])
        o = jax.nn.sigmoid(gates[:, 3 * H:4 * H])
        c = f * c + i * g
        h = o * jnp.tanh(c)
        return (h, c), h

    h0 = jnp.zeros((B, H), jnp.float32)
    c0 = jnp.zeros((B, H), jnp.float32)
    _, hs = jax.lax.scan(step, (h0, c0), x)
    return hs @ w_out.T + b_out


if __name__ == "__main__":
    # Small shapes implied by the module: seq=8, batch=2, input=16, hidden=32, output=16
    T, B, I, H, O = 8, 2, 16, 32, 16

    key = jax.random.PRNGKey(0)
    ks = jax.random.split(key, 8)
    bound = float(1.0 / (H ** 0.5))

    x = jax.random.normal(ks[0], (T, B, I), dtype=jnp.float32)
    w_ih = jax.random.uniform(ks[1], (4 * H, I), jnp.float32, -bound, bound)
    w_hh = jax.random.uniform(ks[2], (4 * H, H), jnp.float32, -bound, bound)
    b_ih = jax.random.uniform(ks[3], (4 * H,), jnp.float32, -bound, bound)
    b_hh = jax.random.uniform(ks[4], (4 * H,), jnp.float32, -bound, bound)
    w_out = jax.random.uniform(ks[5], (O, H), jnp.float32, -bound, bound)
    b_out = jax.random.uniform(ks[6], (O,), jnp.float32, -bound, bound)

    ref = _reference(x, w_ih, w_hh, b_ih, b_hh, w_out, b_out)

    # f32 path, chunked over time (exercises the (h, c) carry across chunks).
    out = lstm_forward(x, w_ih, w_hh, b_ih, b_hh, w_out, b_out, time_chunk=4)
    out = jax.block_until_ready(out)
    assert out.shape == (T, B, O)
    assert jnp.allclose(out, ref, atol=1e-4, rtol=1e-4), "f32 mismatch vs reference"

    # bf16 matmul-operand path (f32 accumulation and state): looser tolerance.
    out_bf16 = jax.block_until_ready(
        lstm_forward(x, w_ih, w_hh, b_ih, b_hh, w_out, b_out,
                     compute_dtype=jnp.bfloat16))
    assert out_bf16.shape == (T, B, O)
    assert jnp.allclose(out_bf16, ref, atol=5e-2, rtol=5e-2), "bf16 mismatch vs reference"

    print("KERNEL_OK")
</pallas_src>

<mosaic_0001>
module attributes {stable_mosaic.version = 11 : i64} {
  func.func @_lstm_kernel(%arg0: i32, %arg1: i32, %arg2: memref<4x8x16xf32, #tpu.memory_space<vmem>>, %arg3: memref<16x512xf32, #tpu.memory_space<vmem>>, %arg4: memref<128x512xf32, #tpu.memory_space<vmem>>, %arg5: memref<1x512xf32, #tpu.memory_space<vmem>>, %arg6: memref<128x128xf32, #tpu.memory_space<vmem>>, %arg7: memref<1x128xf32, #tpu.memory_space<vmem>>, %arg8: memref<4x8x128xf32, #tpu.memory_space<vmem>>, %arg9: memref<4x8x512xf32, #tpu.memory_space<vmem>>, %arg10: memref<4x8x128xf32, #tpu.memory_space<vmem>>, %arg11: memref<2x8x128xf32, #tpu.memory_space<vmem>>) attributes {dimension_semantics = [#tpu.dimension_semantics<parallel>, #tpu.dimension_semantics<arbitrary>], iteration_bounds = array<i64: 1, 2>, scalar_prefetch = 0 : i64, scratch_operands = 3 : i64, tpu.core_type = #tpu.core_type<tc>, window_params = [{transform_indices = @transform_0, window_bounds = array<i64: 4, 8, 16>}, {pipeline_mode = #tpu.pipeline_mode<synchronous>, transform_indices = @transform_1, window_bounds = array<i64: 16, 512>}, {pipeline_mode = #tpu.pipeline_mode<synchronous>, transform_indices = @transform_2, window_bounds = array<i64: 128, 512>}, {pipeline_mode = #tpu.pipeline_mode<synchronous>, transform_indices = @transform_3, window_bounds = array<i64: 1, 512>}, {pipeline_mode = #tpu.pipeline_mode<synchronous>, transform_indices = @transform_4, window_bounds = array<i64: 128, 128>}, {pipeline_mode = #tpu.pipeline_mode<synchronous>, transform_indices = @transform_5, window_bounds = array<i64: 1, 128>}, {transform_indices = @transform_6, window_bounds = array<i64: 4, 8, 128>}]} {
    %c0_i32 = arith.constant 0 : i32
    %0 = arith.cmpi eq, %arg1, %c0_i32 : i32
    %1 = arith.extui %0 : i1 to i32
    %c0_i32_0 = arith.constant 0 : i32
    %2 = arith.cmpi ne, %1, %c0_i32_0 : i32
    scf.if %2 {
      %cst_59 = arith.constant 0.000000e+00 : f32
      %132 = vector.broadcast %cst_59 : f32 to vector<2x8x128xf32>
      %c0_60 = arith.constant 0 : index
      %c0_61 = arith.constant 0 : index
      %c0_62 = arith.constant 0 : index
      %133 = vector.load %arg11[%c0_60, %c0_61, %c0_62] : memref<2x8x128xf32, #tpu.memory_space<vmem>>, vector<2x8x128xf32>
      tpu.vector_store %arg11[%c0_60, %c0_61, %c0_62], %132 {strides = array<i32>} : memref<2x8x128xf32, #tpu.memory_space<vmem>>, vector<2x8x128xf32>,
    } else {
    }
    %c0 = arith.constant 0 : index
    %c0_1 = arith.constant 0 : index
    %c0_2 = arith.constant 0 : index
    %3 = vector.load %arg2[%c0, %c0_1, %c0_2] : memref<4x8x16xf32, #tpu.memory_space<vmem>>, vector<4x8x16xf32>
    %4 = vector.shape_cast %3 : vector<4x8x16xf32> to vector<32x16xf32>
    %c0_3 = arith.constant 0 : index
    %c0_4 = arith.constant 0 : index
    %5 = vector.load %arg3[%c0_3, %c0_4] : memref<16x512xf32, #tpu.memory_space<vmem>>, vector<16x512xf32>
    %cst = arith.constant dense<0.000000e+00> : vector<32x512xf32>
    %6 = tpu.matmul %4, %5, %cst {dimension_numbers = #tpu.dot_dimension_numbers<[1], [0], [0], [1], [0, 0, 1, 1], [], []>} : vector<32x16xf32>, vector<16x512xf32>, vector<32x512xf32> -> vector<32x512xf32>
    %c0_5 = arith.constant 0 : index
    %c0_6 = arith.constant 0 : index
    %7 = vector.load %arg5[%c0_5, %c0_6] : memref<1x512xf32, #tpu.memory_space<vmem>>, vector<1x512xf32>
    %8 = vector.broadcast %7 : vector<1x512xf32> to vector<32x512xf32>
    %9 = arith.addf %6, %8 : vector<32x512xf32>
    %10 = vector.shape_cast %9 : vector<32x512xf32> to vector<4x8x512xf32>
    %c0_7 = arith.constant 0 : index
    %c0_8 = arith.constant 0 : index
    %c0_9 = arith.constant 0 : index
    %11 = vector.load %arg9[%c0_7, %c0_8, %c0_9] : memref<4x8x512xf32, #tpu.memory_space<vmem>>, vector<4x8x512xf32>
    tpu.vector_store %arg9[%c0_7, %c0_8, %c0_9], %10 {strides = array<i32>} : memref<4x8x512xf32, #tpu.memory_space<vmem>>, vector<4x8x512xf32>,
    %c0_10 = arith.constant 0 : index
    %c0_11 = arith.constant 0 : index
    %12 = vector.load %arg4[%c0_10, %c0_11] : memref<128x512xf32, #tpu.memory_space<vmem>>, vector<128x512xf32>
    %c0_12 = arith.constant 0 : index
    %c0_13 = arith.constant 0 : index
    %c0_14 = arith.constant 0 : index
    %13 = vector.load %arg11[%c0_12, %c0_13, %c0_14] : memref<2x8x128xf32, #tpu.memory_space<vmem>>, vector<1x8x128xf32>
    %14 = vector.shape_cast %13 : vector<1x8x128xf32> to vector<8x128xf32>
    %c1 = arith.constant 1 : index
    %c0_15 = arith.constant 0 : index
    %c0_16 = arith.constant 0 : index
    %15 = vector.load %arg11[%c1, %c0_15, %c0_16] : memref<2x8x128xf32, #tpu.memory_space<vmem>>, vector<1x8x128xf32>
    %16 = vector.shape_cast %15 : vector<1x8x128xf32> to vector<8x128xf32>
    %c0_i32_17 = arith.constant 0 : i32
    %17 = arith.index_cast %c0_i32_17 : i32 to index
    %c0_18 = arith.constant 0 : index
    %c0_19 = arith.constant 0 : index
    %18 = vector.load %arg9[%17, %c0_18, %c0_19] : memref<4x8x512xf32, #tpu.memory_space<vmem>>, vector<1x8x512xf32>
    %19 = vector.shape_cast %18 : vector<1x8x512xf32> to vector<8x512xf32>
    %cst_20 = arith.constant dense<0.000000e+00> : vector<8x512xf32>
    %20 = tpu.matmul %14, %12, %cst_20 {dimension_numbers = #tpu.dot_dimension_numbers<[1], [0], [0], [1], [0, 0, 1, 1], [], []>} : vector<8x128xf32>, vector<128x512xf32>, vector<8x512xf32> -> vector<8x512xf32>
    %21 = arith.addf %19, %20 : vector<8x512xf32>
    %22 = vector.extract_strided_slice %21 {offsets = [0, 0], sizes = [8, 384], strides = [1, 1]} : vector<8x512xf32> to vector<8x384xf32>
    %23 = arith.negf %22 : vector<8x384xf32>
    %24 = math.exp %23 : vector<8x384xf32>
    %cst_21 = arith.constant 1.000000e+00 : f32
    %25 = vector.broadcast %cst_21 : f32 to vector<8x384xf32>
    %26 = arith.addf %25, %24 : vector<8x384xf32>
    %27 = arith.divf %25, %26 : vector<8x384xf32>
    %28 = vector.extract_strided_slice %27 {offsets = [0, 0], sizes = [8, 128], strides = [1, 1]} : vector<8x384xf32> to vector<8x128xf32>
    %29 = vector.extract_strided_slice %27 {offsets = [0, 128], sizes = [8, 128], strides = [1, 1]} : vector<8x384xf32> to vector<8x128xf32>
    %30 = vector.extract_strided_slice %27 {offsets = [0, 256], sizes = [8, 128], strides = [1, 1]} : vector<8x384xf32> to vector<8x128xf32>
    %31 = vector.extract_strided_slice %21 {offsets = [0, 384], sizes = [8, 128], strides = [1, 1]} : vector<8x512xf32> to vector<8x128xf32>
    %32 = math.tanh %31 : vector<8x128xf32>
    %33 = arith.mulf %29, %16 : vector<8x128xf32>
    %34 = arith.mulf %28, %32 : vector<8x128xf32>
    %35 = arith.addf %33, %34 : vector<8x128xf32>
    %36 = math.tanh %35 : vector<8x128xf32>
    %37 = arith.mulf %30, %36 : vector<8x128xf32>
    %38 = arith.index_cast %c0_i32_17 : i32 to index
    %c0_22 = arith.constant 0 : index
    %c0_23 = arith.constant 0 : index
    %39 = vector.load %arg10[%38, %c0_22, %c0_23] : memref<4x8x128xf32, #tpu.memory_space<vmem>>, vector<1x8x128xf32>
    %40 = vector.shape_cast %39 : vector<1x8x128xf32> to vector<8x128xf32>
    %41 = vector.shape_cast %37 : vector<8x128xf32> to vector<1x8x128xf32>
    tpu.vector_store %arg10[%38, %c0_22, %c0_23], %41 {strides = array<i32>} : memref<4x8x128xf32, #tpu.memory_space<vmem>>, vector<1x8x128xf32>,
    %c1_i32 = arith.constant 1 : i32
    %42 = arith.index_cast %c1_i32 : i32 to index
    %c0_24 = arith.constant 0 : index
    %c0_25 = arith.constant 0 : index
    %43 = vector.load %arg9[%42, %c0_24, %c0_25] : memref<4x8x512xf32, #tpu.memory_space<vmem>>, vector<1x8x512xf32>
    %44 = vector.shape_cast %43 : vector<1x8x512xf32> to vector<8x512xf32>
    %cst_26 = arith.constant dense<0.000000e+00> : vector<8x512xf32>
    %45 = tpu.matmul %37, %12, %cst_26 {dimension_numbers = #tpu.dot_dimension_numbers<[1], [0], [0], [1], [0, 0, 1, 1], [], []>} : vector<8x128xf32>, vector<128x512xf32>, vector<8x512xf32> -> vector<8x512xf32>
    %46 = arith.addf %44, %45 : vector<8x512xf32>
    %47 = vector.extract_strided_slice %46 {offsets = [0, 0], sizes = [8, 384], strides = [1, 1]} : vector<8x512xf32> to vector<8x384xf32>
    %48 = arith.negf %47 : vector<8x384xf32>
    %49 = math.exp %48 : vector<8x384xf32>
    %cst_27 = arith.constant 1.000000e+00 : f32
    %50 = vector.broadcast %cst_27 : f32 to vector<8x384xf32>
    %51 = arith.addf %50, %49 : vector<8x384xf32>
    %52 = arith.divf %50, %51 : vector<8x384xf32>
    %53 = vector.extract_strided_slice %52 {offsets = [0, 0], sizes = [8, 128], strides = [1, 1]} : vector<8x384xf32> to vector<8x128xf32>
    %54 = vector.extract_strided_slice %52 {offsets = [0, 128], sizes = [8, 128], strides = [1, 1]} : vector<8x384xf32> to vector<8x128xf32>
    %55 = vector.extract_strided_slice %52 {offsets = [0, 256], sizes = [8, 128], strides = [1, 1]} : vector<8x384xf32> to vector<8x128xf32>
    %56 = vector.extract_strided_slice %46 {offsets = [0, 384], sizes = [8, 128], strides = [1, 1]} : vector<8x512xf32> to vector<8x128xf32>
    %57 = math.tanh %56 : vector<8x128xf32>
    %58 = arith.mulf %54, %35 : vector<8x128xf32>
    %59 = arith.mulf %53, %57 : vector<8x128xf32>
    %60 = arith.addf %58, %59 : vector<8x128xf32>
    %61 = math.tanh %60 : vector<8x128xf32>
    %62 = arith.mulf %55, %61 : vector<8x128xf32>
    %63 = arith.index_cast %c1_i32 : i32 to index
    %c0_28 = arith.constant 0 : index
    %c0_29 = arith.constant 0 : index
    %64 = vector.load %arg10[%63, %c0_28, %c0_29] : memref<4x8x128xf32, #tpu.memory_space<vmem>>, vector<1x8x128xf32>
    %65 = vector.shape_cast %64 : vector<1x8x128xf32> to vector<8x128xf32>
    %66 = vector.shape_cast %62 : vector<8x128xf32> to vector<1x8x128xf32>
    tpu.vector_store %arg10[%63, %c0_28, %c0_29], %66 {strides = array<i32>} : memref<4x8x128xf32, #tpu.memory_space<vmem>>, vector<1x8x128xf32>,
    %c2_i32 = arith.constant 2 : i32
    %67 = arith.index_cast %c2_i32 : i32 to index
    %c0_30 = arith.constant 0 : index
    %c0_31 = arith.constant 0 : index
    %68 = vector.load %arg9[%67, %c0_30, %c0_31] : memref<4x8x512xf32, #tpu.memory_space<vmem>>, vector<1x8x512xf32>
    %69 = vector.shape_cast %68 : vector<1x8x512xf32> to vector<8x512xf32>
    %cst_32 = arith.constant dense<0.000000e+00> : vector<8x512xf32>
    %70 = tpu.matmul %62, %12, %cst_32 {dimension_numbers = #tpu.dot_dimension_numbers<[1], [0], [0], [1], [0, 0, 1, 1], [], []>} : vector<8x128xf32>, vector<128x512xf32>, vector<8x512xf32> -> vector<8x512xf32>
    %71 = arith.addf %69, %70 : vector<8x512xf32>
    %72 = vector.extract_strided_slice %71 {offsets = [0, 0], sizes = [8, 384], strides = [1, 1]} : vector<8x512xf32> to vector<8x384xf32>
    %73 = arith.negf %72 : vector<8x384xf32>
    %74 = math.exp %73 : vector<8x384xf32>
    %cst_33 = arith.constant 1.000000e+00 : f32
    %75 = vector.broadcast %cst_33 : f32 to vector<8x384xf32>
    %76 = arith.addf %75, %74 : vector<8x384xf32>
    %77 = arith.divf %75, %76 : vector<8x384xf32>
    %78 = vector.extract_strided_slice %77 {offsets = [0, 0], sizes = [8, 128], strides = [1, 1]} : vector<8x384xf32> to vector<8x128xf32>
    %79 = vector.extract_strided_slice %77 {offsets = [0, 128], sizes = [8, 128], strides = [1, 1]} : vector<8x384xf32> to vector<8x128xf32>
    %80 = vector.extract_strided_slice %77 {offsets = [0, 256], sizes = [8, 128], strides = [1, 1]} : vector<8x384xf32> to vector<8x128xf32>
    %81 = vector.extract_strided_slice %71 {offsets = [0, 384], sizes = [8, 128], strides = [1, 1]} : vector<8x512xf32> to vector<8x128xf32>
    %82 = math.tanh %81 : vector<8x128xf32>
    %83 = arith.mulf %79, %60 : vector<8x128xf32>
    %84 = arith.mulf %78, %82 : vector<8x128xf32>
    %85 = arith.addf %83, %84 : vector<8x128xf32>
    %86 = math.tanh %85 : vector<8x128xf32>
    %87 = arith.mulf %80, %86 : vector<8x128xf32>
    %88 = arith.index_cast %c2_i32 : i32 to index
    %c0_34 = arith.constant 0 : index
    %c0_35 = arith.constant 0 : index
    %89 = vector.load %arg10[%88, %c0_34, %c0_35] : memref<4x8x128xf32, #tpu.memory_space<vmem>>, vector<1x8x128xf32>
    %90 = vector.shape_cast %89 : vector<1x8x128xf32> to vector<8x128xf32>
    %91 = vector.shape_cast %87 : vector<8x128xf32> to vector<1x8x128xf32>
    tpu.vector_store %arg10[%88, %c0_34, %c0_35], %91 {strides = array<i32>} : memref<4x8x128xf32, #tpu.memory_space<vmem>>, vector<1x8x128xf32>,
    %c3_i32 = arith.constant 3 : i32
    %92 = arith.index_cast %c3_i32 : i32 to index
    %c0_36 = arith.constant 0 : index
    %c0_37 = arith.constant 0 : index
    %93 = vector.load %arg9[%92, %c0_36, %c0_37] : memref<4x8x512xf32, #tpu.memory_space<vmem>>, vector<1x8x512xf32>
    %94 = vector.shape_cast %93 : vector<1x8x512xf32> to vector<8x512xf32>
    %cst_38 = arith.constant dense<0.000000e+00> : vector<8x512xf32>
    %95 = tpu.matmul %87, %12, %cst_38 {dimension_numbers = #tpu.dot_dimension_numbers<[1], [0], [0], [1], [0, 0, 1, 1], [], []>} : vector<8x128xf32>, vector<128x512xf32>, vector<8x512xf32> -> vector<8x512xf32>
    %96 = arith.addf %94, %95 : vector<8x512xf32>
    %97 = vector.extract_strided_slice %96 {offsets = [0, 0], sizes = [8, 384], strides = [1, 1]} : vector<8x512xf32> to vector<8x384xf32>
    %98 = arith.negf %97 : vector<8x384xf32>
    %99 = math.exp %98 : vector<8x384xf32>
    %cst_39 = arith.constant 1.000000e+00 : f32
    %100 = vector.broadcast %cst_39 : f32 to vector<8x384xf32>
    %101 = arith.addf %100, %99 : vector<8x384xf32>
    %102 = arith.divf %100, %101 : vector<8x384xf32>
    %103 = vector.extract_strided_slice %102 {offsets = [0, 0], sizes = [8, 128], strides = [1, 1]} : vector<8x384xf32> to vector<8x128xf32>
    %104 = vector.extract_strided_slice %102 {offsets = [0, 128], sizes = [8, 128], strides = [1, 1]} : vector<8x384xf32> to vector<8x128xf32>
    %105 = vector.extract_strided_slice %102 {offsets = [0, 256], sizes = [8, 128], strides = [1, 1]} : vector<8x384xf32> to vector<8x128xf32>
    %106 = vector.extract_strided_slice %96 {offsets = [0, 384], sizes = [8, 128], strides = [1, 1]} : vector<8x512xf32> to vector<8x128xf32>
    %107 = math.tanh %106 : vector<8x128xf32>
    %108 = arith.mulf %104, %85 : vector<8x128xf32>
    %109 = arith.mulf %103, %107 : vector<8x128xf32>
    %110 = arith.addf %108, %109 : vector<8x128xf32>
    %111 = math.tanh %110 : vector<8x128xf32>
    %112 = arith.mulf %105, %111 : vector<8x128xf32>
    %113 = arith.index_cast %c3_i32 : i32 to index
    %c0_40 = arith.constant 0 : index
    %c0_41 = arith.constant 0 : index
    %114 = vector.load %arg10[%113, %c0_40, %c0_41] : memref<4x8x128xf32, #tpu.memory_space<vmem>>, vector<1x8x128xf32>
    %115 = vector.shape_cast %114 : vector<1x8x128xf32> to vector<8x128xf32>
    %116 = vector.shape_cast %112 : vector<8x128xf32> to vector<1x8x128xf32>
    tpu.vector_store %arg10[%113, %c0_40, %c0_41], %116 {strides = array<i32>} : memref<4x8x128xf32, #tpu.memory_space<vmem>>, vector<1x8x128xf32>,
    %c4_i32 = arith.constant 4 : i32
    %c0_42 = arith.constant 0 : index
    %c0_43 = arith.constant 0 : index
    %c0_44 = arith.constant 0 : index
    %117 = vector.load %arg11[%c0_42, %c0_43, %c0_44] : memref<2x8x128xf32, #tpu.memory_space<vmem>>, vector<1x8x128xf32>
    %118 = vector.shape_cast %117 : vector<1x8x128xf32> to vector<8x128xf32>
    %119 = vector.shape_cast %112 : vector<8x128xf32> to vector<1x8x128xf32>
    tpu.vector_store %arg11[%c0_42, %c0_43, %c0_44], %119 {strides = array<i32>} : memref<2x8x128xf32, #tpu.memory_space<vmem>>, vector<1x8x128xf32>,
    %c1_45 = arith.constant 1 : index
    %c0_46 = arith.constant 0 : index
    %c0_47 = arith.constant 0 : index
    %120 = vector.load %arg11[%c1_45, %c0_46, %c0_47] : memref<2x8x128xf32, #tpu.memory_space<vmem>>, vector<1x8x128xf32>
    %121 = vector.shape_cast %120 : vector<1x8x128xf32> to vector<8x128xf32>
    %122 = vector.shape_cast %110 : vector<8x128xf32> to vector<1x8x128xf32>
    tpu.vector_store %arg11[%c1_45, %c0_46, %c0_47], %122 {strides = array<i32>} : memref<2x8x128xf32, #tpu.memory_space<vmem>>, vector<1x8x128xf32>,
    %c0_48 = arith.constant 0 : index
    %c0_49 = arith.constant 0 : index
    %c0_50 = arith.constant 0 : index
    %123 = vector.load %arg10[%c0_48, %c0_49, %c0_50] : memref<4x8x128xf32, #tpu.memory_space<vmem>>, vector<4x8x128xf32>
    %124 = vector.shape_cast %123 : vector<4x8x128xf32> to vector<32x128xf32>
    %c0_51 = arith.constant 0 : index
    %c0_52 = arith.constant 0 : index
    %125 = vector.load %arg6[%c0_51, %c0_52] : memref<128x128xf32, #tpu.memory_space<vmem>>, vector<128x128xf32>
    %cst_53 = arith.constant dense<0.000000e+00> : vector<32x128xf32>
    %126 = tpu.matmul %124, %125, %cst_53 {dimension_numbers = #tpu.dot_dimension_numbers<[1], [0], [0], [1], [0, 0, 1, 1], [], []>} : vector<32x128xf32>, vector<128x128xf32>, vector<32x128xf32> -> vector<32x128xf32>
    %c0_54 = arith.constant 0 : index
    %c0_55 = arith.constant 0 : index
    %127 = vector.load %arg7[%c0_54, %c0_55] : memref<1x128xf32, #tpu.memory_space<vmem>>, vector<1x128xf32>
    %128 = vector.broadcast %127 : vector<1x128xf32> to vector<32x128xf32>
    %129 = arith.addf %126, %128 : vector<32x128xf32>
    %130 = vector.shape_cast %129 : vector<32x128xf32> to vector<4x8x128xf32>
    %c0_56 = arith.constant 0 : index
    %c0_57 = arith.constant 0 : index
    %c0_58 = arith.constant 0 : index
    %131 = vector.load %arg8[%c0_56, %c0_57, %c0_58] : memref<4x8x128xf32, #tpu.memory_space<vmem>>, vector<4x8x128xf32>
    tpu.vector_store %arg8[%c0_56, %c0_57, %c0_58], %130 {strides = array<i32>} : memref<4x8x128xf32, #tpu.memory_space<vmem>>, vector<4x8x128xf32>,
    return
  }
  func.func @transform_0(%arg0: i32, %arg1: i32) -> (i32, i32, i32) {
    %c0_i32 = arith.constant 0 : i32
    %c0_i32_0 = arith.constant 0 : i32
    return %arg1, %arg0, %c0_i32 : i32, i32, i32
  }
  func.func @transform_1(%arg0: i32, %arg1: i32) -> (i32, i32) {
    %c0_i32 = arith.constant 0 : i32
    %c0_i32_0 = arith.constant 0 : i32
    %c0_i32_1 = arith.constant 0 : i32
    return %c0_i32, %c0_i32_0 : i32, i32
  }
  func.func @transform_2(%arg0: i32, %arg1: i32) -> (i32, i32) {
    %c0_i32 = arith.constant 0 : i32
    %c0_i32_0 = arith.constant 0 : i32
    %c0_i32_1 = arith.constant 0 : i32
    return %c0_i32, %c0_i32_0 : i32, i32
  }
  func.func @transform_3(%arg0: i32, %arg1: i32) -> (i32, i32) {
    %c0_i32 = arith.constant 0 : i32
    %c0_i32_0 = arith.constant 0 : i32
    %c0_i32_1 = arith.constant 0 : i32
    return %c0_i32, %c0_i32_0 : i32, i32
  }
  func.func @transform_4(%arg0: i32, %arg1: i32) -> (i32, i32) {
    %c0_i32 = arith.constant 0 : i32
    %c0_i32_0 = arith.constant 0 : i32
    %c0_i32_1 = arith.constant 0 : i32
    return %c0_i32, %c0_i32_0 : i32, i32
  }
  func.func @transform_5(%arg0: i32, %arg1: i32) -> (i32, i32) {
    %c0_i32 = arith.constant 0 : i32
    %c0_i32_0 = arith.constant 0 : i32
    %c0_i32_1 = arith.constant 0 : i32
    return %c0_i32, %c0_i32_0 : i32, i32
  }
  func.func @transform_6(%arg0: i32, %arg1: i32) -> (i32, i32, i32) {
    %c0_i32 = arith.constant 0 : i32
    %c0_i32_0 = arith.constant 0 : i32
    return %arg1, %arg0, %c0_i32 : i32, i32, i32
  }
}

</mosaic_0001>

<llo_original>
// kernel: tpu_custom_call.1
$region0: #{tpu_custom_call.1}
  #allocation0 [shape = 'u32[]', space=smem, size = 0x4, offset = 0x4, fixed_abs, tag = 'smem constant byte address 0x4 - core index']
  #allocation1 [shape = 'u32[144,128]{1,0:T(1,128)}', space=vmem, size = 0x12000, scoped, tag = 'internal scratch']
  #allocation2 [shape = 'f32[4,8,512]{2,1,0:T(8,128)}', space=vmem, size = 0x10000, scoped, tag = 'scratch operand']
  #allocation3 [shape = 'f32[4,8,128]{2,1,0:T(8,128)}', space=vmem, size = 0x4000, scoped, tag = 'scratch operand']
  #allocation4 [shape = 'f32[2,8,128]{2,1,0:T(8,128)}', space=vmem, size = 0x2000, scoped, tag = 'scratch operand']
  %s0 = inlined_call_operand.hbm [shape: f32[8,8,16], index: 0, kind: input, shape index: {}]
  %s1 = inlined_call_operand.hbm [shape: f32[16,512], index: 1, kind: input, shape index: {}]
  %s2 = inlined_call_operand.hbm [shape: f32[128,512], index: 2, kind: input, shape index: {}]
  %s3 = inlined_call_operand.vmem [shape: f32[1,512], index: 3, kind: input, shape index: {}]
  %s4 = inlined_call_operand.hbm [shape: f32[128,128], index: 4, kind: input, shape index: {}]
  %s5 = inlined_call_operand.vmem [shape: f32[1,128], index: 5, kind: input, shape index: {}]
  %s6 = inlined_call_operand.hbm [shape: f32[8,8,128], index: 6, kind: output, shape index: {}]
  %s7 = sld [smem:[#allocation0]]
  $region77: #{tpu_custom_call.1} parent=0
    _
  %s9 = ssub.s32 1, %s7
  %s10 = scalar_select 0, %s9, %s7
  $region1: #{tpu_custom_call.1} parent=0
    #allocation5 [shape = 'u8[32768]{0}', space=vmem, size = 0x8000, scoped, tag = 'input window, operand 0']
    #allocation6 [shape = 's32[2]{0}', space=sflag, size = 0x8, scoped, tag = 'scoped memory for tpu_custom_call.1']
    #allocation7 [shape = 's32[2]{0}', space=sflag, size = 0x8, scoped, tag = 'scoped memory for tpu_custom_call.1']
    #allocation8 [shape = 'u8[32768]{0}', space=vmem, size = 0x8000, scoped, tag = 'input window, operand 1, single buffered']
    #allocation9 [shape = 's32[1]{0}', space=sflag, size = 0x4, scoped, tag = 'scoped memory for tpu_custom_call.1']
    #allocation10 [shape = 'u8[262144]{0}', space=vmem, size = 0x40000, scoped, tag = 'input window, operand 2, single buffered']
    #allocation11 [shape = 'u8[65536]{0}', space=vmem, size = 0x10000, scoped, tag = 'input window, operand 4, single buffered']
    #allocation12 [shape = 's32[1]{0}', space=sflag, size = 0x4, scoped, tag = 'scoped memory for tpu_custom_call.1']
    #allocation13 [shape = 'u8[32768]{0}', space=vmem, size = 0x8000, scoped, tag = 'output window, operand 0']
    %11 = vsyncpa [#allocation6], 0
    %s12 = scalar_lea.sflag [#allocation6], 1
    %13 = vsyncpa %s12, 0
    %14 = vsyncpa [#allocation9], 0
    %15 = vsyncpa [#allocation12], 0
    %16 = vsyncpa [#allocation7], 0
    %s17 = scalar_lea.sflag [#allocation7], 1
    %18 = vsyncpa %s17, 0
    loop: start=0, step=1, limit=4
    $region2: #{tpu_custom_call.1} parent=1 // loop_pre_header
      _
    $region3: #{tpu_custom_call.1} parent=1 // loop_header
      %s20 = sphi 0, %s24
      %p21 = scmp.ge.s32.totalorder %s20, 4
      %s27 = sphi 0, %s39
      %s28 = sphi 0, %s35
      %s29 = sphi 0, %s27
      %s30 = sphi 0, %s28
      %s31 = sphi 0, %s29
      %s32 = sphi 0, %s30
      %s44 = sphi 0, %s46
      %s47 = sphi 0, %s44
      %s48 = sphi 0, %s47
      %s64 = sphi 0, %s48
      %s68 = sphi 0, %s68
      %s70 = sphi 0, %s68
      %s71 = sphi 0, %s70
      %s85 = sphi 0, %s71
      %s89 = sphi 0, %s89
      %s91 = sphi 0, %s89
      %s92 = sphi 0, %s91
      %s106 = sphi 0, %s92
      %s110 = sphi 0, %s110
      %s112 = sphi 0, %s110
      %s113 = sphi 0, %s112
      %s127 = sphi 0, %s113
      %s131 = sphi 0, %s131
      %s133 = sphi 0, %s131
      %s134 = sphi 0, %s133
      %s148 = sphi 0, %s134
      %s152 = sphi 0, %s152
      %s154 = sphi 0, %s152
      %s155 = sphi 0, %s154
      %s169 = sphi 0, %s155
      %s177 = sphi 0, %s179
      %s180 = sphi 0, %s177
      %s181 = sphi 0, %s180
      %s197 = sphi 0, %s181
    $region4: #{tpu_custom_call.1} parent=1 // loop_header_branch
      %23 = sbr.rel (%p21) target = $region8
    $region5: #{tpu_custom_call.1} parent=1 // loop_body
      %s25 = ssub.s32 %s20, 1
      %s26 = ssub.s32 %s20, 2
      %s33 = sadd.s32 1, %s28
      %p34 = scmp.ge.s32.totalorder %s33, 2
      %s35 = scalar_select %p34, 0, %s33
      %s36 = sadd.s32 1, %s27
      %s37 = scalar_select %p34, %s36, %s27
      %p38 = scmp.ge.s32.totalorder %s37, 1
      %s39 = scalar_select %p38, 0, %s37
      %s40 = ssub.s32 %s28, %s35
      %s41 = ssub.s32 %s27, %s39
      %s42 = sor.u32 %s40, %s41
      %p43 = scmp.eq.s32.totalorder %s42, 0
      %s45 = sadd.s32 %s44, 1
      %s46 = scalar_select %p43, %s44, %s45
      %p49 = pneg %p43
      %p50 = scmp.eq.s32.totalorder %s20, 1
      %p51 = por %p49, %p50
      %p52 = scmp.ne.s32.totalorder %s44, %s47
      %p53 = scmp.eq.s32.totalorder %s20, 0
      %p54 = por %p52, %p53
      %p55 = scmp.ne.s32.totalorder %s44, %s47
      %p56 = scmp.eq.s32.totalorder %s25, 1
      %p57 = por %p55, %p56
      %p58 = scmp.ne.s32.totalorder %s47, %s48
      %p59 = scmp.eq.s32.totalorder %s25, 0
      %p60 = por %p58, %p59
      %p61 = scmp.ne.s32.totalorder %s47, %s48
      %p62 = scmp.eq.s32.totalorder %s26, 1
      %p63 = por %p61, %p62
      %p65 = scmp.ne.s32.totalorder %s48, %s64
      %p66 = scmp.eq.s32.totalorder %s26, 0
      %p67 = por %p65, %p66
      %s69 = sadd.s32 %s68, 1
      %p72 = scmp.eq.s32.totalorder %s20, 1
      %p73 = scmp.ne.s32.totalorder %s68, %s70
      %p74 = scmp.eq.s32.totalorder %s20, 0
      %p75 = por %p73, %p74
      %p76 = scmp.ne.s32.totalorder %s68, %s70
      %p77 = scmp.eq.s32.totalorder %s25, 1
      %p78 = por %p76, %p77
      %p79 = scmp.ne.s32.totalorder %s70, %s71
      %p80 = scmp.eq.s32.totalorder %s25, 0
      %p81 = por %p79, %p80
      %p82 = scmp.ne.s32.totalorder %s70, %s71
      %p83 = scmp.eq.s32.totalorder %s26, 1
      %p84 = por %p82, %p83
      %p86 = scmp.ne.s32.totalorder %s71, %s85
      %p87 = scmp.eq.s32.totalorder %s26, 0
      %p88 = por %p86, %p87
      %s90 = sadd.s32 %s89, 1
      %p93 = scmp.eq.s32.totalorder %s20, 1
      %p94 = scmp.ne.s32.totalorder %s89, %s91
      %p95 = scmp.eq.s32.totalorder %s20, 0
      %p96 = por %p94, %p95
      %p97 = scmp.ne.s32.totalorder %s89, %s91
      %p98 = scmp.eq.s32.totalorder %s25, 1
      %p99 = por %p97, %p98
      %p100 = scmp.ne.s32.totalorder %s91, %s92
      %p101 = scmp.eq.s32.totalorder %s25, 0
      %p102 = por %p100, %p101
      %p103 = scmp.ne.s32.totalorder %s91, %s92
      %p104 = scmp.eq.s32.totalorder %s26, 1
      %p105 = por %p103, %p104
      %p107 = scmp.ne.s32.totalorder %s92, %s106
      %p108 = scmp.eq.s32.totalorder %s26, 0
      %p109 = por %p107, %p108
      %s111 = sadd.s32 %s110, 1
      %p114 = scmp.eq.s32.totalorder %s20, 1
      %p115 = scmp.ne.s32.totalorder %s110, %s112
      %p116 = scmp.eq.s32.totalorder %s20, 0
      %p117 = por %p115, %p116
      %p118 = scmp.ne.s32.totalorder %s110, %s112
      %p119 = scmp.eq.s32.totalorder %s25, 1
      %p120 = por %p118, %p119
      %p121 = scmp.ne.s32.totalorder %s112, %s113
      %p122 = scmp.eq.s32.totalorder %s25, 0
      %p123 = por %p121, %p122
      %p124 = scmp.ne.s32.totalorder %s112, %s113
      %p125 = scmp.eq.s32.totalorder %s26, 1
      %p126 = por %p124, %p125
      %p128 = scmp.ne.s32.totalorder %s113, %s127
      %p129 = scmp.eq.s32.totalorder %s26, 0
      %p130 = por %p128, %p129
      %s132 = sadd.s32 %s131, 1
      %p135 = scmp.eq.s32.totalorder %s20, 1
      %p136 = scmp.ne.s32.totalorder %s131, %s133
      %p137 = scmp.eq.s32.totalorder %s20, 0
      %p138 = por %p136, %p137
      %p139 = scmp.ne.s32.totalorder %s131, %s133
      %p140 = scmp.eq.s32.totalorder %s25, 1
      %p141 = por %p139, %p140
      %p142 = scmp.ne.s32.totalorder %s133, %s134
      %p143 = scmp.eq.s32.totalorder %s25, 0
      %p144 = por %p142, %p143
      %p145 = scmp.ne.s32.totalorder %s133, %s134
      %p146 = scmp.eq.s32.totalorder %s26, 1
      %p147 = por %p145, %p146
      %p149 = scmp.ne.s32.totalorder %s134, %s148
      %p150 = scmp.eq.s32.totalorder %s26, 0
      %p151 = por %p149, %p150
      %s153 = sadd.s32 %s152, 1
      %p156 = scmp.eq.s32.totalorder %s20, 1
      %p157 = scmp.ne.s32.totalorder %s152, %s154
      %p158 = scmp.eq.s32.totalorder %s20, 0
      %p159 = por %p157, %p158
      %p160 = scmp.ne.s32.totalorder %s152, %s154
      %p161 = scmp.eq.s32.totalorder %s25, 1
      %p162 = por %p160, %p161
      %p163 = scmp.ne.s32.totalorder %s154, %s155
      %p164 = scmp.eq.s32.totalorder %s25, 0
      %p165 = por %p163, %p164
      %p166 = scmp.ne.s32.totalorder %s154, %s155
      %p167 = scmp.eq.s32.totalorder %s26, 1
      %p168 = por %p166, %p167
      %p170 = scmp.ne.s32.totalorder %s155, %s169
      %p171 = scmp.eq.s32.totalorder %s26, 0
      %p172 = por %p170, %p171
      %s173 = ssub.s32 %s28, %s35
      %s174 = ssub.s32 %s27, %s39
      %s175 = sor.u32 %s173, %s174
      %p176 = scmp.eq.s32.totalorder %s175, 0
      %s178 = sadd.s32 %s177, 1
      %s179 = scalar_select %p176, %s177, %s178
      %p182 = pneg %p176
      %p183 = scmp.eq.s32.totalorder %s20, 1
      %p184 = por %p182, %p183
      %p185 = scmp.ne.s32.totalorder %s177, %s180
      %p186 = scmp.eq.s32.totalorder %s20, 0
      %p187 = por %p185, %p186
      %p188 = scmp.ne.s32.totalorder %s177, %s180
      %p189 = scmp.eq.s32.totalorder %s25, 1
      %p190 = por %p188, %p189
      %p191 = scmp.ne.s32.totalorder %s180, %s181
      %p192 = scmp.eq.s32.totalorder %s25, 0
      %p193 = por %p191, %p192
      %p194 = scmp.ne.s32.totalorder %s180, %s181
      %p195 = scmp.eq.s32.totalorder %s26, 1
      %p196 = por %p194, %p195
      %p198 = scmp.ne.s32.totalorder %s181, %s197
      %p199 = scmp.eq.s32.totalorder %s26, 0
      %p200 = por %p198, %p199
      %p201 = scmp.le.s32.totalorder 1, %s20
      %p202 = scmp.lt.s32.totalorder %s20, 3
      %p203 = pnand %p201, %p202
      %p204 = pneg %p203
      // Predicated region
      $region9: #{tpu_custom_call.1} parent=5 // pred_check
        _
      $region10: #{tpu_custom_call.1} parent=5 // pred_check_branch
        %206 = sbr.rel (%p203) target = $region12
      $region11: #{tpu_custom_call.1} parent=5 // pred_region
        %s207 = ssub.s32 %s20, 1
        // Predicated region
        $region13: #{tpu_custom_call.1} parent=11 // pred_check
          %p208 = pneg %p81
        $region14: #{tpu_custom_call.1} parent=11 // pred_check_branch
          %210 = sbr.rel (%p208) target = $region16
        $region15: #{tpu_custom_call.1} parent=11 // pred_region
          %s212 = ssub.s32 1024, 1024
          %213 = vsyncadd [#allocation9], %s212
          %s214 = sshll.u32 [#allocation8], 4
          %s215 = int_to_ptr.vmem [resolvable:$true] %s214
          %220 = dma.hbm_to_vmem [thread:$0]  %s1, 1024, %s215, [#allocation9], 512, 512, 32
        $region16: #{tpu_custom_call.1} parent=11 // pred_fallthru
          _
        // Predicated region
        $region17: #{tpu_custom_call.1} parent=11 // pred_check
          %p221 = pneg %p102
        $region18: #{tpu_custom_call.1} parent=11 // pred_check_branch
          %223 = sbr.rel (%p221) target = $region20
        $region19: #{tpu_custom_call.1} parent=11 // pred_region
          %s225 = ssub.s32 8192, 8192
          %226 = vsyncadd [#allocation9], %s225
          %s227 = sshll.u32 [#allocation10], 4
          %s228 = int_to_ptr.vmem [resolvable:$true] %s227
          %233 = dma.hbm_to_vmem [thread:$0]  %s2, 8192, %s228, [#allocation9], 512, 512, 32
        $region20: #{tpu_custom_call.1} parent=11 // pred_fallthru
          _
        // Predicated region
        $region21: #{tpu_custom_call.1} parent=11 // pred_check
          %p234 = pneg %p123
        $region22: #{tpu_custom_call.1} parent=11 // pred_check_branch
          %236 = sbr.rel (%p234) target = $region24
        $region23: #{tpu_custom_call.1} parent=11 // pred_region
          _
        $region24: #{tpu_custom_call.1} parent=11 // pred_fallthru
          _
        // Predicated region
        $region25: #{tpu_custom_call.1} parent=11 // pred_check
          %p237 = pneg %p144
        $region26: #{tpu_custom_call.1} parent=11 // pred_check_branch
          %239 = sbr.rel (%p237) target = $region28
        $region27: #{tpu_custom_call.1} parent=11 // pred_region
          %s241 = ssub.s32 2048, 2048
          %242 = vsyncadd [#allocation12], %s241
          %s243 = sshll.u32 [#allocation11], 4
          %s244 = int_to_ptr.vmem [resolvable:$true] %s243
          %249 = dma.hbm_to_vmem [thread:$0]  %s4, 2048, %s244, [#allocation12], 128, 128, 8
        $region28: #{tpu_custom_call.1} parent=11 // pred_fallthru
          _
        // Predicated region
        $region29: #{tpu_custom_call.1} parent=11 // pred_check
          %p250 = pneg %p165
        $region30: #{tpu_custom_call.1} parent=11 // pred_check_branch
          %252 = sbr.rel (%p250) target = $region32
        $region31: #{tpu_custom_call.1} parent=11 // pred_region
          _
        $region32: #{tpu_custom_call.1} parent=11 // pred_fallthru
          _
      $region12: #{tpu_custom_call.1} parent=5 // pred_fallthru
        _
      %p253 = scmp.lt.s32.totalorder %s20, 2
      // Predicated region
      $region33: #{tpu_custom_call.1} parent=5 // pred_check
        %p254 = pneg %p253
      $region34: #{tpu_custom_call.1} parent=5 // pred_check_branch
        %256 = sbr.rel (%p254) target = $region36
      $region35: #{tpu_custom_call.1} parent=5 // pred_region
        // Predicated region
        $region37: #{tpu_custom_call.1} parent=35 // pred_check
          %p257 = pneg %p54
        $region38: #{tpu_custom_call.1} parent=35 // pred_check_branch
          %259 = sbr.rel (%p257) target = $region40
        $region39: #{tpu_custom_call.1} parent=35 // pred_region
          %s260 = sand.u32 %s44, 1
          %s261 = scalar_lea.sflag [#allocation6], %s260
          %s262 = sand.u32 %s44, 1
          %s263 = smul.addr %s262, 32
          %s264 = scalar_lea.vmem [#allocation5], %s263
          %s265 = smul.u32 4, %s28
          %s267 = ssub.s32 512, 512
          %268 = vsyncadd %s261, %s267
          %s269 = sadd.s32 %s27, %s265
          %s270 = smul.addr %s269, 128
          %s271 = scalar_lea.hbm %s0, %s270
          %s272 = sshll.u32 %s264, 4
          %s273 = int_to_ptr.vmem [resolvable:$true] %s272
          %278 = dma.hbm_to_vmem [thread:$0]  %s271, 512, %s273, %s261, 128, 128, 8
        $region40: #{tpu_custom_call.1} parent=35 // pred_fallthru
          _
      $region36: #{tpu_custom_call.1} parent=5 // pred_fallthru
        _
      %p279 = scmp.le.s32.totalorder 1, %s20
      %p280 = scmp.lt.s32.totalorder %s20, 3
      %p281 = pnand %p279, %p280
      %p282 = pneg %p281
      // Predicated region
      $region41: #{tpu_custom_call.1} parent=5 // pred_check
        _
      $region42: #{tpu_custom_call.1} parent=5 // pred_check_branch
        %284 = sbr.rel (%p281) target = $region44
      $region43: #{tpu_custom_call.1} parent=5 // pred_region
        %s285 = ssub.s32 %s20, 1
        %s286 = sand.u32 %s47, 1
        %s287 = scalar_lea.sflag [#allocation6], %s286
        %s288 = sand.u32 %s47, 1
        %s289 = smul.addr %s288, 32
        %s290 = scalar_lea.vmem [#allocation5], %s289
        // Predicated region
        $region45: #{tpu_custom_call.1} parent=43 // pred_check
          %p291 = pneg %p60
        $region46: #{tpu_custom_call.1} parent=43 // pred_check_branch
          %293 = sbr.rel (%p291) target = $region48
        $region47: #{tpu_custom_call.1} parent=43 // pred_region
          %294 = dma.done %s287, 512
        $region48: #{tpu_custom_call.1} parent=43 // pred_fallthru
          _
        // Predicated region
        $region49: #{tpu_custom_call.1} parent=43 // pred_check
          %p295 = pneg %p81
        $region50: #{tpu_custom_call.1} parent=43 // pred_check_branch
          %297 = sbr.rel (%p295) target = $region52
        $region51: #{tpu_custom_call.1} parent=43 // pred_region
          %298 = dma.done [#allocation9], 1024
        $region52: #{tpu_custom_call.1} parent=43 // pred_fallthru
          _
        // Predicated region
        $region53: #{tpu_custom_call.1} parent=43 // pred_check
          %p299 = pneg %p102
        $region54: #{tpu_custom_call.1} parent=43 // pred_check_branch
          %301 = sbr.rel (%p299) target = $region56
        $region55: #{tpu_custom_call.1} parent=43 // pred_region
          %302 = dma.done [#allocation9], 8192
        $region56: #{tpu_custom_call.1} parent=43 // pred_fallthru
          _
        // Predicated region
        $region57: #{tpu_custom_call.1} parent=43 // pred_check
          %p303 = pneg %p144
        $region58: #{tpu_custom_call.1} parent=43 // pred_check_branch
          %305 = sbr.rel (%p303) target = $region60
        $region59: #{tpu_custom_call.1} parent=43 // pred_region
          %306 = dma.done [#allocation12], 2048
        $region60: #{tpu_custom_call.1} parent=43 // pred_fallthru
          _
        %s307 = sand.u32 %s47, 1
        %s308 = scalar_lea.sflag [#allocation6], %s307
        %s309 = sand.u32 %s47, 1
        %s310 = smul.addr %s309, 32
        %s311 = scalar_lea.vmem [#allocation5], %s310
        %p312 = pneg %p60
        %p313 = pneg %p57
        %p314 = pneg %p81
        %p315 = pneg %p78
        %p316 = pneg %p102
        %p317 = pneg %p99
        %p318 = pneg %p123
        %p319 = pneg %p120
        %p320 = pneg %p144
        %p321 = pneg %p141
        %p322 = pneg %p165
        %p323 = pneg %p162
        %p324 = pneg %p193
        %p325 = pneg %p190
        %s326 = sand.u32 %s180, 1
        %s327 = scalar_lea.sflag [#allocation7], %s326
        %s328 = sand.u32 %s180, 1
        %s329 = smul.addr %s328, 32
        %s330 = scalar_lea.vmem [#allocation13], %s329
        %s331 = smul.u32 4, %s30
        %s332 = smul.u32 4, %s30
        %p333 = scmp.eq.s32.totalorder %s30, 0
        // Predicated region
        $region61: #{tpu_custom_call.1} parent=43 // pred_check
          %p334 = pneg %p333
        $region62: #{tpu_custom_call.1} parent=43 // pred_check_branch
          %336 = sbr.rel (%p334) target = $region64
        $region63: #{tpu_custom_call.1} parent=43 // pred_region
          %337 = vst [vmem:[#allocation4] sm:$0xff] 0.0
          %338 = vst [vmem:[#allocation4 + $0x8] sm:$0xff] 0.0
        $region64: #{tpu_custom_call.1} parent=43 // pred_fallthru
          _
        %v339 = vld [vmem:[%s290] sm:$0xff]
        %v340 = vld [vmem:[%s290 + $0x8] sm:$0xff]
        %v341 = vld [vmem:[%s290 + $0x10] sm:$0xff]
        %v342 = vld [vmem:[%s290 + $0x18] sm:$0xff]
        %v343 = vld [vmem:[#allocation8] sm:$0xff]
        %v344 = vld [vmem:[#allocation8 + $0x8] sm:$0xff]
        %v345 = vld [vmem:[#allocation8 + $0x10] sm:$0xff]
        %v346 = vld [vmem:[#allocation8 + $0x18] sm:$0xff]
        %v347 = vld [vmem:[#allocation8 + $0x20] sm:$0xff]
        %v348 = vld [vmem:[#allocation8 + $0x28] sm:$0xff]
        %v349 = vld [vmem:[#allocation8 + $0x30] sm:$0xff]
        %v350 = vld [vmem:[#allocation8 + $0x38] sm:$0xff]
        %v351 = vld [vmem:[%s3] sm:$0xf]
        %v353 = vlaneseq
        %v354 = vshrl.u32 %v353, 7
        %v355 = vsub.s32 0, %v354
        %v356 = vrot.slane %v351, %v355
        %v357 = vlaneseq
        %v358 = vshrl.u32 %v357, 7
        %v359 = vsub.s32 1, %v358
        %v360 = vrot.slane %v351, %v359
        %v361 = vlaneseq
        %v362 = vshrl.u32 %v361, 7
        %v363 = vsub.s32 2, %v362
        %v364 = vrot.slane %v351, %v363
        %v365 = vlaneseq
        %v366 = vshrl.u32 %v365, 7
        %v367 = vsub.s32 3, %v366
        %v368 = vrot.slane %v351, %v367
        %vm373 = vcmask 130048
        %v375 = vsel %vm373, %v339, 0
        %v378 = vsel %vm373, %v340, 0
        %v381 = vsel %vm373, %v341, 0
        %v384 = vsel %vm373, %v342, 0
        %386 = vmatprep.subr.mxu0 %v344
        %387 = vmatpush1.msra.mxu0 %v343
        %388 = vmatprep.subr.mxu0 %v348
        %389 = vmatpush1.msra.mxu0 %v347
        %390 = vmatprep.subr.mxu0 0.0
        %391 = vmatpush1.msra.mxu0 0.0
        %392 = vmatprep.subr.mxu0 0.0
        %393 = vmatpush1.msra.mxu0 0.0
        %394 = vmatprep.subr.mxu0 0.0
        %395 = vmatpush1.msra.mxu0 0.0
        %396 = vmatprep.subr.mxu0 0.0
        %397 = vmatpush1.msra.mxu0 0.0
        %398 = vmatprep.subr.mxu0 0.0
        %399 = vmatpush1.msra.mxu0 0.0
        %400 = vmatprep.subr.mxu0 0.0
        %401 = vmatpush1.msra.mxu0 0.0
        %402 = vmatprep.subr.mxu0 0.0
        %403 = vmatpush1.msra.mxu0 0.0
        %404 = vmatprep.subr.mxu0 0.0
        %405 = vmatpush1.msra.mxu0 0.0
        %406 = vmatprep.subr.mxu0 0.0
        %407 = vmatpush1.msra.mxu0 0.0
        %408 = vmatprep.subr.mxu0 0.0
        %409 = vmatpush1.msra.mxu0 0.0
        %410 = vmatprep.subr.mxu0 0.0
        %411 = vmatpush1.msra.mxu0 0.0
        %412 = vmatprep.subr.mxu0 0.0
        %413 = vmatpush1.msra.mxu0 0.0
        %414 = vmatprep.subr.mxu0 0.0
        %415 = vmatpush1.msra.mxu0 0.0
        %416 = vmatprep.subr.mxu0 0.0
        %417 = vmatpush1.msra.mxu0 0.0
        %418 = vmatprep.subr.mxu0 0.0
        %419 = vmatpush1.msra.mxu0 0.0
        %420 = vmatprep.subr.mxu0 0.0
        %421 = vmatpush1.msra.mxu0 0.0
        %422 = vmatprep.subr.mxu0 0.0
        %423 = vmatpush1.msra.mxu0 0.0
        %424 = vmatprep.subr.mxu0 0.0
        %425 = vmatpush1.msra.mxu0 0.0
        %426 = vmatprep.subr.mxu0 0.0
        %427 = vmatpush1.msra.mxu0 0.0
        %428 = vmatprep.subr.mxu0 0.0
        %429 = vmatpush1.msra.mxu0 0.0
        %430 = vmatprep.subr.mxu0 0.0
        %431 = vmatpush1.msra.mxu0 0.0
        %432 = vmatprep.subr.mxu0 0.0
        %433 = vmatpush1.msra.mxu0 0.0
        %434 = vmatprep.subr.mxu0 0.0
        %435 = vmatpush1.msra.mxu0 0.0
        %436 = vmatprep.subr.mxu0 0.0
        %437 = vmatpush1.msra.mxu0 0.0
        %438 = vmatprep.subr.mxu0 0.0
        %439 = vmatpush1.msra.mxu0 0.0
        %440 = vmatprep.subr.mxu0 0.0
        %441 = vmatpush1.msra.mxu0 0.0
        %442 = vmatprep.subr.mxu0 0.0
        %443 = vmatpush1.msra.mxu0 0.0
        %444 = vmatprep.subr.mxu0 0.0
        %445 = vmatpush1.msra.mxu0 0.0
        %446 = vmatprep.subr.mxu0 0.0
        %447 = vmatpush1.msra.mxu0 0.0
        %448 = vmatprep.subr.mxu0 0.0
        %449 = vmatpush1.msra.mxu0 0.0
        %450 = vmatprep.mubr.f32.mxu0 0.0
        %451 = vmatmul.mubr.f32.gmra.mrb[0].mxu0 %v375
        %v452 = vpop.f32.mrb[0].mxu0
        %v453 = vadd.f32 %v356, %v452
        %v454 = vpop.f32.mrb[0].mxu0
        %v455 = vadd.f32 %v360, %v454
        %456 = vmatprep.mubr.f32.mxu0 0.0
        %457 = vmatmul.mubr.f32.gmra.mrb[0].mxu0 %v378
        %v458 = vpop.f32.mrb[0].mxu0
        %v459 = vadd.f32 %v356, %v458
        %v460 = vpop.f32.mrb[0].mxu0
        %v461 = vadd.f32 %v360, %v460
        %462 = vmatprep.mubr.f32.mxu0 0.0
        %463 = vmatmul.mubr.f32.gmra.mrb[0].mxu0 %v381
        %v464 = vpop.f32.mrb[0].mxu0
        %v465 = vadd.f32 %v356, %v464
        %v466 = vpop.f32.mrb[0].mxu0
        %v467 = vadd.f32 %v360, %v466
        %468 = vmatprep.mubr.f32.mxu0 0.0
        %469 = vmatmul.mubr.f32.gmra.mrb[0].mxu0 %v384
        %v470 = vpop.f32.mrb[0].mxu0
        %v471 = vadd.f32 %v356, %v470
        %v472 = vpop.f32.mrb[0].mxu0
        %v473 = vadd.f32 %v360, %v472
        %474 = vdwg.mxu0
        %475 = vmatprep.subr.mxu0 %v346
        %476 = vmatpush1.msra.mxu0 %v345
        %477 = vmatprep.subr.mxu0 %v350
        %478 = vmatpush1.msra.mxu0 %v349
        %479 = vmatprep.subr.mxu0 0.0
        %480 = vmatpush1.msra.mxu0 0.0
        %481 = vmatprep.subr.mxu0 0.0
        %482 = vmatpush1.msra.mxu0 0.0
        %483 = vmatprep.subr.mxu0 0.0
        %484 = vmatpush1.msra.mxu0 0.0
        %485 = vmatprep.subr.mxu0 0.0
        %486 = vmatpush1.msra.mxu0 0.0
        %487 = vmatprep.subr.mxu0 0.0
        %488 = vmatpush1.msra.mxu0 0.0
        %489 = vmatprep.subr.mxu0 0.0
        %490 = vmatpush1.msra.mxu0 0.0
        %491 = vmatprep.subr.mxu0 0.0
        %492 = vmatpush1.msra.mxu0 0.0
        %493 = vmatprep.subr.mxu0 0.0
        %494 = vmatpush1.msra.mxu0 0.0
        %495 = vmatprep.subr.mxu0 0.0
        %496 = vmatpush1.msra.mxu0 0.0
        %497 = vmatprep.subr.mxu0 0.0
        %498 = vmatpush1.msra.mxu0 0.0
        %499 = vmatprep.subr.mxu0 0.0
        %500 = vmatpush1.msra.mxu0 0.0
        %501 = vmatprep.subr.mxu0 0.0
        %502 = vmatpush1.msra.mxu0 0.0
        %503 = vmatprep.subr.mxu0 0.0
        %504 = vmatpush1.msra.mxu0 0.0
        %505 = vmatprep.subr.mxu0 0.0
        %506 = vmatpush1.msra.mxu0 0.0
        %507 = vmatprep.subr.mxu0 0.0
        %508 = vmatpush1.msra.mxu0 0.0
        %509 = vmatprep.subr.mxu0 0.0
        %510 = vmatpush1.msra.mxu0 0.0
        %511 = vmatprep.subr.mxu0 0.0
        %512 = vmatpush1.msra.mxu0 0.0
        %513 = vmatprep.subr.mxu0 0.0
        %514 = vmatpush1.msra.mxu0 0.0
        %515 = vmatprep.subr.mxu0 0.0
        %516 = vmatpush1.msra.mxu0 0.0
        %517 = vmatprep.subr.mxu0 0.0
        %518 = vmatpush1.msra.mxu0 0.0
        %519 = vmatprep.subr.mxu0 0.0
        %520 = vmatpush1.msra.mxu0 0.0
        %521 = vmatprep.subr.mxu0 0.0
        %522 = vmatpush1.msra.mxu0 0.0
        %523 = vmatprep.subr.mxu0 0.0
        %524 = vmatpush1.msra.mxu0 0.0
        %525 = vmatprep.subr.mxu0 0.0
        %526 = vmatpush1.msra.mxu0 0.0
        %527 = vmatprep.subr.mxu0 0.0
        %528 = vmatpush1.msra.mxu0 0.0
        %529 = vmatprep.subr.mxu0 0.0
        %530 = vmatpush1.msra.mxu0 0.0
        %531 = vmatprep.subr.mxu0 0.0
        %532 = vmatpush1.msra.mxu0 0.0
        %533 = vmatprep.subr.mxu0 0.0
        %534 = vmatpush1.msra.mxu0 0.0
        %535 = vmatprep.subr.mxu0 0.0
        %536 = vmatpush1.msra.mxu0 0.0
        %537 = vmatprep.subr.mxu0 0.0
        %538 = vmatpush1.msra.mxu0 0.0
        %539 = vmatprep.mubr.f32.mxu0 0.0
        %540 = vmatmul.mubr.f32.gmra.mrb[0].mxu0 %v375
        %v541 = vpop.f32.mrb[0].mxu0
        %v542 = vadd.f32 %v364, %v541
        %v543 = vpop.f32.mrb[0].mxu0
        %v544 = vadd.f32 %v368, %v543
        %545 = vmatprep.mubr.f32.mxu0 0.0
        %546 = vmatmul.mubr.f32.gmra.mrb[0].mxu0 %v378
        %v547 = vpop.f32.mrb[0].mxu0
        %v548 = vadd.f32 %v364, %v547
        %v549 = vpop.f32.mrb[0].mxu0
        %v550 = vadd.f32 %v368, %v549
        %551 = vmatprep.mubr.f32.mxu0 0.0
        %552 = vmatmul.mubr.f32.gmra.mrb[0].mxu0 %v381
        %v553 = vpop.f32.mrb[0].mxu0
        %v554 = vadd.f32 %v364, %v553
        %v555 = vpop.f32.mrb[0].mxu0
        %v556 = vadd.f32 %v368, %v555
        %557 = vmatprep.mubr.f32.mxu0 0.0
        %558 = vmatmul.mubr.f32.gmra.mrb[0].mxu0 %v384
        %v559 = vpop.f32.mrb[0].mxu0
        %v560 = vadd.f32 %v364, %v559
        %v561 = vpop.f32.mrb[0].mxu0
        %v562 = vadd.f32 %v368, %v561
        %563 = vdwg.mxu0
        %564 = vst [vmem:[#allocation2] sm:$0xff] %v453
        %565 = vst [vmem:[#allocation2 + $0x8] sm:$0xff] %v455
        %566 = vst [vmem:[#allocation2 + $0x10] sm:$0xff] %v542
        %567 = vst [vmem:[#allocation2 + $0x18] sm:$0xff] %v544
        %568 = vst [vmem:[#allocation2 + $0x20] sm:$0xff] %v459
        %569 = vst [vmem:[#allocation2 + $0x28] sm:$0xff] %v461
        %570 = vst [vmem:[#allocation2 + $0x30] sm:$0xff] %v548
        %571 = vst [vmem:[#allocation2 + $0x38] sm:$0xff] %v550
        %572 = vst [vmem:[#allocation2 + $0x40] sm:$0xff] %v465
        %573 = vst [vmem:[#allocation2 + $0x48] sm:$0xff] %v467
        %574 = vst [vmem:[#allocation2 + $0x50] sm:$0xff] %v554
        %575 = vst [vmem:[#allocation2 + $0x58] sm:$0xff] %v556
        %576 = vst [vmem:[#allocation2 + $0x60] sm:$0xff] %v471
        %577 = vst [vmem:[#allocation2 + $0x68] sm:$0xff] %v473
        %578 = vst [vmem:[#allocation2 + $0x70] sm:$0xff] %v560
        %579 = vst [vmem:[#allocation2 + $0x78] sm:$0xff] %v562
        %v580 = vld [vmem:[#allocation10] sm:$0xff]
        %v581 = vld [vmem:[#allocation10 + $0x8] sm:$0xff]
        %v582 = vld [vmem:[#allocation10 + $0x10] sm:$0xff]
        %v583 = vld [vmem:[#allocation10 + $0x18] sm:$0xff]
        %v584 = vld [vmem:[#allocation10 + $0x20] sm:$0xff]
        %v585 = vld [vmem:[#allocation10 + $0x28] sm:$0xff]
        %v586 = vld [vmem:[#allocation10 + $0x30] sm:$0xff]
        %v587 = vld [vmem:[#allocation10 + $0x38] sm:$0xff]
        %v588 = vld [vmem:[#allocation10 + $0x40] sm:$0xff]
        %v589 = vld [vmem:[#allocation10 + $0x48] sm:$0xff]
        %v590 = vld [vmem:[#allocation10 + $0x50] sm:$0xff]
        %v591 = vld [vmem:[#allocation10 + $0x58] sm:$0xff]
        %v592 = vld [vmem:[#allocation10 + $0x60] sm:$0xff]
        %v593 = vld [vmem:[#allocation10 + $0x68] sm:$0xff]
        %v594 = vld [vmem:[#allocation10 + $0x70] sm:$0xff]
        %v595 = vld [vmem:[#allocation10 + $0x78] sm:$0xff]
        %v596 = vld [vmem:[#allocation10 + $0x80] sm:$0xff]
        %v597 = vld [vmem:[#allocation10 + $0x88] sm:$0xff]
        %v598 = vld [vmem:[#allocation10 + $0x90] sm:$0xff]
        %v599 = vld [vmem:[#allocation10 + $0x98] sm:$0xff]
        %v600 = vld [vmem:[#allocation10 + $0xa0] sm:$0xff]
        %v601 = vld [vmem:[#allocation10 + $0xa8] sm:$0xff]
        %v602 = vld [vmem:[#allocation10 + $0xb0] sm:$0xff]
        %v603 = vld [vmem:[#allocation10 + $0xb8] sm:$0xff]
        %v604 = vld [vmem:[#allocation10 + $0xc0] sm:$0xff]
        %v605 = vld [vmem:[#allocation10 + $0xc8] sm:$0xff]
        %v606 = vld [vmem:[#allocation10 + $0xd0] sm:$0xff]
        %v607 = vld [vmem:[#allocation10 + $0xd8] sm:$0xff]
        %v608 = vld [vmem:[#allocation10 + $0xe0] sm:$0xff]
        %v609 = vld [vmem:[#allocation10 + $0xe8] sm:$0xff]
        %v610 = vld [vmem:[#allocation10 + $0xf0] sm:$0xff]
        %v611 = vld [vmem:[#allocation10 + $0xf8] sm:$0xff]
        %v612 = vld [vmem:[#allocation10 + $0x100] sm:$0xff]
        %v613 = vld [vmem:[#allocation10 + $0x108] sm:$0xff]
        %v614 = vld [vmem:[#allocation10 + $0x110] sm:$0xff]
        %v615 = vld [vmem:[#allocation10 + $0x118] sm:$0xff]
        %v616 = vld [vmem:[#allocation10 + $0x120] sm:$0xff]
        %v617 = vld [vmem:[#allocation10 + $0x128] sm:$0xff]
        %v618 = vld [vmem:[#allocation10 + $0x130] sm:$0xff]
        %v619 = vld [vmem:[#allocation10 + $0x138] sm:$0xff]
        %v620 = vld [vmem:[#allocation10 + $0x140] sm:$0xff]
        %v621 = vld [vmem:[#allocation10 + $0x148] sm:$0xff]
        %v622 = vld [vmem:[#allocation10 + $0x150] sm:$0xff]
        %v623 = vld [vmem:[#allocation10 + $0x158] sm:$0xff]
        %v624 = vld [vmem:[#allocation10 + $0x160] sm:$0xff]
        %v625 = vld [vmem:[#allocation10 + $0x168] sm:$0xff]
        %v626 = vld [vmem:[#allocation10 + $0x170] sm:$0xff]
        %v627 = vld [vmem:[#allocation10 + $0x178] sm:$0xff]
        %v628 = vld [vmem:[#allocation10 + $0x180] sm:$0xff]
        %v629 = vld [vmem:[#allocation10 + $0x188] sm:$0xff]
        %v630 = vld [vmem:[#allocation10 + $0x190] sm:$0xff]
        %v631 = vld [vmem:[#allocation10 + $0x198] sm:$0xff]
        %v632 = vld [vmem:[#allocation10 + $0x1a0] sm:$0xff]
        %v633 = vld [vmem:[#allocation10 + $0x1a8] sm:$0xff]
        %v634 = vld [vmem:[#allocation10 + $0x1b0] sm:$0xff]
        %v635 = vld [vmem:[#allocation10 + $0x1b8] sm:$0xff]
        %v636 = vld [vmem:[#allocation10 + $0x1c0] sm:$0xff]
        %v637 = vld [vmem:[#allocation10 + $0x1c8] sm:$0xff]
        %v638 = vld [vmem:[#allocation10 + $0x1d0] sm:$0xff]
        %v639 = vld [vmem:[#allocation10 + $0x1d8] sm:$0xff]
        %v640 = vld [vmem:[#allocation10 + $0x1e0] sm:$0xff]
        %v641 = vld [vmem:[#allocation10 + $0x1e8] sm:$0xff]
        %v642 = vld [vmem:[#allocation10 + $0x1f0] sm:$0xff]
        %v643 = vld [vmem:[#allocation10 + $0x1f8] sm:$0xff]
        %v644 = vld [vmem:[#allocation4] sm:$0xff]
        %s645 = scalar_lea.vmem [#allocation4], 8
        %v646 = vld [vmem:[%s645] sm:$0xff]
        %v647 = vld [vmem:[#allocation2] sm:$0xff]
        %v648 = vld [vmem:[#allocation2 + $0x8] sm:$0xff]
        %v649 = vld [vmem:[#allocation2 + $0x10] sm:$0xff]
        %v650 = vld [vmem:[#allocation2 + $0x18] sm:$0xff]
        %651 = vmatprep.subr.mxu0 %v581
        %652 = vmatpush1.msra.mxu0 %v580
        %653 = vmatprep.subr.mxu0 %v585
        %654 = vmatpush1.msra.mxu0 %v584
        %655 = vmatprep.subr.mxu0 %v589
        %656 = vmatpush1.msra.mxu0 %v588
        %657 = vmatprep.subr.mxu0 %v593
        %658 = vmatpush1.msra.mxu0 %v592
        %659 = vmatprep.subr.mxu0 %v597
        %660 = vmatpush1.msra.mxu0 %v596
        %661 = vmatprep.subr.mxu0 %v601
        %662 = vmatpush1.msra.mxu0 %v600
        %663 = vmatprep.subr.mxu0 %v605
        %664 = vmatpush1.msra.mxu0 %v604
        %665 = vmatprep.subr.mxu0 %v609
        %666 = vmatpush1.msra.mxu0 %v608
        %667 = vmatprep.subr.mxu0 %v613
        %668 = vmatpush1.msra.mxu0 %v612
        %669 = vmatprep.subr.mxu0 %v617
        %670 = vmatpush1.msra.mxu0 %v616
        %671 = vmatprep.subr.mxu0 %v621
        %672 = vmatpush1.msra.mxu0 %v620
        %673 = vmatprep.subr.mxu0 %v625
        %674 = vmatpush1.msra.mxu0 %v624
        %675 = vmatprep.subr.mxu0 %v629
        %676 = vmatpush1.msra.mxu0 %v628
        %677 = vmatprep.subr.mxu0 %v633
        %678 = vmatpush1.msra.mxu0 %v632
        %679 = vmatprep.subr.mxu0 %v637
        %680 = vmatpush1.msra.mxu0 %v636
        %681 = vmatprep.subr.mxu0 %v641
        %682 = vmatpush1.msra.mxu0 %v640
        %683 = vmatprep.subr.mxu0 0.0
        %684 = vmatpush1.msra.mxu0 0.0
        %685 = vmatprep.subr.mxu0 0.0
        %686 = vmatpush1.msra.mxu0 0.0
        %687 = vmatprep.subr.mxu0 0.0
        %688 = vmatpush1.msra.mxu0 0.0
        %689 = vmatprep.subr.mxu0 0.0
        %690 = vmatpush1.msra.mxu0 0.0
        %691 = vmatprep.subr.mxu0 0.0
        %692 = vmatpush1.msra.mxu0 0.0
        %693 = vmatprep.subr.mxu0 0.0
        %694 = vmatpush1.msra.mxu0 0.0
        %695 = vmatprep.subr.mxu0 0.0
        %696 = vmatpush1.msra.mxu0 0.0
        %697 = vmatprep.subr.mxu0 0.0
        %698 = vmatpush1.msra.mxu0 0.0
        %699 = vmatprep.subr.mxu0 0.0
        %700 = vmatpush1.msra.mxu0 0.0
        %701 = vmatprep.subr.mxu0 0.0
        %702 = vmatpush1.msra.mxu0 0.0
        %703 = vmatprep.subr.mxu0 0.0
        %704 = vmatpush1.msra.mxu0 0.0
        %705 = vmatprep.subr.mxu0 0.0
        %706 = vmatpush1.msra.mxu0 0.0
        %707 = vmatprep.subr.mxu0 0.0
        %708 = vmatpush1.msra.mxu0 0.0
        %709 = vmatprep.subr.mxu0 0.0
        %710 = vmatpush1.msra.mxu0 0.0
        %711 = vmatprep.subr.mxu0 0.0
        %712 = vmatpush1.msra.mxu0 0.0
        %713 = vmatprep.subr.mxu0 0.0
        %714 = vmatpush1.msra.mxu0 0.0
        %715 = vmatprep.mubr.f32.mxu0 0.0
        %716 = vmatmul.mubr.f32.gmra.mrb[0].mxu0 %v644
        %v717 = vpop.f32.mrb[0].mxu0
        %v718 = vadd.f32 0.0, %v717
        %v719 = vpop.f32.mrb[0].mxu0
        %v720 = vadd.f32 0.0, %v719
        %721 = vdwg.mxu0
        %722 = vmatprep.subr.mxu0 %v583
        %723 = vmatpush1.msra.mxu0 %v582
        %724 = vmatprep.subr.mxu0 %v587
        %725 = vmatpush1.msra.mxu0 %v586
        %726 = vmatprep.subr.mxu0 %v591
        %727 = vmatpush1.msra.mxu0 %v590
        %728 = vmatprep.subr.mxu0 %v595
        %729 = vmatpush1.msra.mxu0 %v594
        %730 = vmatprep.subr.mxu0 %v599
        %731 = vmatpush1.msra.mxu0 %v598
        %732 = vmatprep.subr.mxu0 %v603
        %733 = vmatpush1.msra.mxu0 %v602
        %734 = vmatprep.subr.mxu0 %v607
        %735 = vmatpush1.msra.mxu0 %v606
        %736 = vmatprep.subr.mxu0 %v611
        %737 = vmatpush1.msra.mxu0 %v610
        %738 = vmatprep.subr.mxu0 %v615
        %739 = vmatpush1.msra.mxu0 %v614
        %740 = vmatprep.subr.mxu0 %v619
        %741 = vmatpush1.msra.mxu0 %v618
        %742 = vmatprep.subr.mxu0 %v623
        %743 = vmatpush1.msra.mxu0 %v622
        %744 = vmatprep.subr.mxu0 %v627
        %745 = vmatpush1.msra.mxu0 %v626
        %746 = vmatprep.subr.mxu0 %v631
        %747 = vmatpush1.msra.mxu0 %v630
        %748 = vmatprep.subr.mxu0 %v635
        %749 = vmatpush1.msra.mxu0 %v634
        %750 = vmatprep.subr.mxu0 %v639
        %751 = vmatpush1.msra.mxu0 %v638
        %752 = vmatprep.subr.mxu0 %v643
        %753 = vmatpush1.msra.mxu0 %v642
        %754 = vmatprep.subr.mxu0 0.0
        %755 = vmatpush1.msra.mxu0 0.0
        %756 = vmatprep.subr.mxu0 0.0
        %757 = vmatpush1.msra.mxu0 0.0
        %758 = vmatprep.subr.mxu0 0.0
        %759 = vmatpush1.msra.mxu0 0.0
        %760 = vmatprep.subr.mxu0 0.0
        %761 = vmatpush1.msra.mxu0 0.0
        %762 = vmatprep.subr.mxu0 0.0
        %763 = vmatpush1.msra.mxu0 0.0
        %764 = vmatprep.subr.mxu0 0.0
        %765 = vmatpush1.msra.mxu0 0.0
        %766 = vmatprep.subr.mxu0 0.0
        %767 = vmatpush1.msra.mxu0 0.0
        %768 = vmatprep.subr.mxu0 0.0
        %769 = vmatpush1.msra.mxu0 0.0
        %770 = vmatprep.subr.mxu0 0.0
        %771 = vmatpush1.msra.mxu0 0.0
        %772 = vmatprep.subr.mxu0 0.0
        %773 = vmatpush1.msra.mxu0 0.0
        %774 = vmatprep.subr.mxu0 0.0
        %775 = vmatpush1.msra.mxu0 0.0
        %776 = vmatprep.subr.mxu0 0.0
        %777 = vmatpush1.msra.mxu0 0.0
        %778 = vmatprep.subr.mxu0 0.0
        %779 = vmatpush1.msra.mxu0 0.0
        %780 = vmatprep.subr.mxu0 0.0
        %781 = vmatpush1.msra.mxu0 0.0
        %782 = vmatprep.subr.mxu0 0.0
        %783 = vmatpush1.msra.mxu0 0.0
        %784 = vmatprep.subr.mxu0 0.0
        %785 = vmatpush1.msra.mxu0 0.0
        %786 = vmatprep.mubr.f32.mxu0 0.0
        %787 = vmatmul.mubr.f32.gmra.mrb[0].mxu0 %v644
        %v788 = vpop.f32.mrb[0].mxu0
        %v789 = vadd.f32 0.0, %v788
        %v790 = vpop.f32.mrb[0].mxu0
        %v791 = vadd.f32 0.0, %v790
        %792 = vdwg.mxu0
        %v793 = vadd.f32 %v647, %v718
        %v794 = vadd.f32 %v648, %v720
        %v795 = vadd.f32 %v649, %v789
        %v796 = vadd.f32 %v650, %v791
        %v797 = vxor.u32 %v793, 2147483648
        %v798 = vxor.u32 %v794, 2147483648
        %v799 = vxor.u32 %v795, 2147483648
        %v800 = vmul.f32 %v797, 1.442695
        %v801 = vpow.pop %v800
        %v802 = vmul.f32 %v798, 1.442695
        %v803 = vpow.pop %v802
        %v804 = vmul.f32 %v799, 1.442695
        %v805 = vpow.pop %v804
        %v806 = vadd.f32 %v801, 1.0
        %v807 = vadd.f32 %v803, 1.0
        %v808 = vadd.f32 %v805, 1.0
        %v809 = vrcp.pop %v806
        %v810 = vmul.f32 1.0, %v809
        %v811 = vrcp.pop %v807
        %v812 = vmul.f32 1.0, %v811
        %v813 = vrcp.pop %v808
        %v814 = vmul.f32 1.0, %v813
        %v815 = vtanh.pop %v796
        %v816 = vmul.f32 %v812, %v646
        %v817 = vmul.f32 %v810, %v815
        %v818 = vadd.f32 %v816, %v817
        %v819 = vtanh.pop %v818
        %v820 = vmul.f32 %v814, %v819
        %821 = vst [vmem:[#allocation3] sm:$0xff] %v820
        %s822 = scalar_lea.vmem [#allocation2], 32
        %v823 = vld [vmem:[%s822] sm:$0xff]
        %v824 = vld [vmem:[%s822 + $0x8] sm:$0xff]
        %v825 = vld [vmem:[%s822 + $0x10] sm:$0xff]
        %v826 = vld [vmem:[%s822 + $0x18] sm:$0xff]
        %827 = vmatprep.subr.mxu0 %v581
        %828 = vmatpush1.msra.mxu0 %v580
        %829 = vmatprep.subr.mxu0 %v585
        %830 = vmatpush1.msra.mxu0 %v584
        %831 = vmatprep.subr.mxu0 %v589
        %832 = vmatpush1.msra.mxu0 %v588
        %833 = vmatprep.subr.mxu0 %v593
        %834 = vmatpush1.msra.mxu0 %v592
        %835 = vmatprep.subr.mxu0 %v597
        %836 = vmatpush1.msra.mxu0 %v596
        %837 = vmatprep.subr.mxu0 %v601
        %838 = vmatpush1.msra.mxu0 %v600
        %839 = vmatprep.subr.mxu0 %v605
        %840 = vmatpush1.msra.mxu0 %v604
        %841 = vmatprep.subr.mxu0 %v609
        %842 = vmatpush1.msra.mxu0 %v608
        %843 = vmatprep.subr.mxu0 %v613
        %844 = vmatpush1.msra.mxu0 %v612
        %845 = vmatprep.subr.mxu0 %v617
        %846 = vmatpush1.msra.mxu0 %v616
        %847 = vmatprep.subr.mxu0 %v621
        %848 = vmatpush1.msra.mxu0 %v620
        %849 = vmatprep.subr.mxu0 %v625
        %850 = vmatpush1.msra.mxu0 %v624
        %851 = vmatprep.subr.mxu0 %v629
        %852 = vmatpush1.msra.mxu0 %v628
        %853 = vmatprep.subr.mxu0 %v633
        %854 = vmatpush1.msra.mxu0 %v632
        %855 = vmatprep.subr.mxu0 %v637
        %856 = vmatpush1.msra.mxu0 %v636
        %857 = vmatprep.subr.mxu0 %v641
        %858 = vmatpush1.msra.mxu0 %v640
        %859 = vmatprep.subr.mxu0 0.0
        %860 = vmatpush1.msra.mxu0 0.0
        %861 = vmatprep.subr.mxu0 0.0
        %862 = vmatpush1.msra.mxu0 0.0
        %863 = vmatprep.subr.mxu0 0.0
        %864 = vmatpush1.msra.mxu0 0.0
        %865 = vmatprep.subr.mxu0 0.0
        %866 = vmatpush1.msra.mxu0 0.0
        %867 = vmatprep.subr.mxu0 0.0
        %868 = vmatpush1.msra.mxu0 0.0
        %869 = vmatprep.subr.mxu0 0.0
        %870 = vmatpush1.msra.mxu0 0.0
        %871 = vmatprep.subr.mxu0 0.0
        %872 = vmatpush1.msra.mxu0 0.0
        %873 = vmatprep.subr.mxu0 0.0
        %874 = vmatpush1.msra.mxu0 0.0
        %875 = vmatprep.subr.mxu0 0.0
        %876 = vmatpush1.msra.mxu0 0.0
        %877 = vmatprep.subr.mxu0 0.0
        %878 = vmatpush1.msra.mxu0 0.0
        %879 = vmatprep.subr.mxu0 0.0
        %880 = vmatpush1.msra.mxu0 0.0
        %881 = vmatprep.subr.mxu0 0.0
        %882 = vmatpush1.msra.mxu0 0.0
        %883 = vmatprep.subr.mxu0 0.0
        %884 = vmatpush1.msra.mxu0 0.0
        %885 = vmatprep.subr.mxu0 0.0
        %886 = vmatpush1.msra.mxu0 0.0
        %887 = vmatprep.subr.mxu0 0.0
        %888 = vmatpush1.msra.mxu0 0.0
        %889 = vmatprep.subr.mxu0 0.0
        %890 = vmatpush1.msra.mxu0 0.0
        %891 = vmatprep.mubr.f32.mxu0 0.0
        %892 = vmatmul.mubr.f32.gmra.mrb[0].mxu0 %v820
        %v893 = vpop.f32.mrb[0].mxu0
        %v894 = vadd.f32 0.0, %v893
        %v895 = vpop.f32.mrb[0].mxu0
        %v896 = vadd.f32 0.0, %v895
        %897 = vdwg.mxu0
        %898 = vmatprep.subr.mxu0 %v583
        %899 = vmatpush1.msra.mxu0 %v582
        %900 = vmatprep.subr.mxu0 %v587
        %901 = vmatpush1.msra.mxu0 %v586
        %902 = vmatprep.subr.mxu0 %v591
        %903 = vmatpush1.msra.mxu0 %v590
        %904 = vmatprep.subr.mxu0 %v595
        %905 = vmatpush1.msra.mxu0 %v594
        %906 = vmatprep.subr.mxu0 %v599
        %907 = vmatpush1.msra.mxu0 %v598
        %908 = vmatprep.subr.mxu0 %v603
        %909 = vmatpush1.msra.mxu0 %v602
        %910 = vmatprep.subr.mxu0 %v607
        %911 = vmatpush1.msra.mxu0 %v606
        %912 = vmatprep.subr.mxu0 %v611
        %913 = vmatpush1.msra.mxu0 %v610
        %914 = vmatprep.subr.mxu0 %v615
        %915 = vmatpush1.msra.mxu0 %v614
        %916 = vmatprep.subr.mxu0 %v619
        %917 = vmatpush1.msra.mxu0 %v618
        %918 = vmatprep.subr.mxu0 %v623
        %919 = vmatpush1.msra.mxu0 %v622
        %920 = vmatprep.subr.mxu0 %v627
        %921 = vmatpush1.msra.mxu0 %v626
        %922 = vmatprep.subr.mxu0 %v631
        %923 = vmatpush1.msra.mxu0 %v630
        %924 = vmatprep.subr.mxu0 %v635
        %925 = vmatpush1.msra.mxu0 %v634
        %926 = vmatprep.subr.mxu0 %v639
        %927 = vmatpush1.msra.mxu0 %v638
        %928 = vmatprep.subr.mxu0 %v643
        %929 = vmatpush1.msra.mxu0 %v642
        %930 = vmatprep.subr.mxu0 0.0
        %931 = vmatpush1.msra.mxu0 0.0
        %932 = vmatprep.subr.mxu0 0.0
        %933 = vmatpush1.msra.mxu0 0.0
        %934 = vmatprep.subr.mxu0 0.0
        %935 = vmatpush1.msra.mxu0 0.0
        %936 = vmatprep.subr.mxu0 0.0
        %937 = vmatpush1.msra.mxu0 0.0
        %938 = vmatprep.subr.mxu0 0.0
        %939 = vmatpush1.msra.mxu0 0.0
        %940 = vmatprep.subr.mxu0 0.0
        %941 = vmatpush1.msra.mxu0 0.0
        %942 = vmatprep.subr.mxu0 0.0
        %943 = vmatpush1.msra.mxu0 0.0
        %944 = vmatprep.subr.mxu0 0.0
        %945 = vmatpush1.msra.mxu0 0.0
        %946 = vmatprep.subr.mxu0 0.0
        %947 = vmatpush1.msra.mxu0 0.0
        %948 = vmatprep.subr.mxu0 0.0
        %949 = vmatpush1.msra.mxu0 0.0
        %950 = vmatprep.subr.mxu0 0.0
        %951 = vmatpush1.msra.mxu0 0.0
        %952 = vmatprep.subr.mxu0 0.0
        %953 = vmatpush1.msra.mxu0 0.0
        %954 = vmatprep.subr.mxu0 0.0
        %955 = vmatpush1.msra.mxu0 0.0
        %956 = vmatprep.subr.mxu0 0.0
        %957 = vmatpush1.msra.mxu0 0.0
        %958 = vmatprep.subr.mxu0 0.0
        %959 = vmatpush1.msra.mxu0 0.0
        %960 = vmatprep.subr.mxu0 0.0
        %961 = vmatpush1.msra.mxu0 0.0
        %962 = vmatprep.mubr.f32.mxu0 0.0
        %963 = vmatmul.mubr.f32.gmra.mrb[0].mxu0 %v820
        %v964 = vpop.f32.mrb[0].mxu0
        %v965 = vadd.f32 0.0, %v964
        %v966 = vpop.f32.mrb[0].mxu0
        %v967 = vadd.f32 0.0, %v966
        %968 = vdwg.mxu0
        %v969 = vadd.f32 %v823, %v894
        %v970 = vadd.f32 %v824, %v896
        %v971 = vadd.f32 %v825, %v965
        %v972 = vadd.f32 %v826, %v967
        %v973 = vxor.u32 %v969, 2147483648
        %v974 = vxor.u32 %v970, 2147483648
        %v975 = vxor.u32 %v971, 2147483648
        %v976 = vmul.f32 %v973, 1.442695
        %v977 = vpow.pop %v976
        %v978 = vmul.f32 %v974, 1.442695
        %v979 = vpow.pop %v978
        %v980 = vmul.f32 %v975, 1.442695
        %v981 = vpow.pop %v980
        %v982 = vadd.f32 %v977, 1.0
        %v983 = vadd.f32 %v979, 1.0
        %v984 = vadd.f32 %v981, 1.0
        %v985 = vrcp.pop %v982
        %v986 = vmul.f32 1.0, %v985
        %v987 = vrcp.pop %v983
        %v988 = vmul.f32 1.0, %v987
        %v989 = vrcp.pop %v984
        %v990 = vmul.f32 1.0, %v989
        %v991 = vtanh.pop %v972
        %v992 = vmul.f32 %v988, %v818
        %v993 = vmul.f32 %v986, %v991
        %v994 = vadd.f32 %v992, %v993
        %v995 = vtanh.pop %v994
        %v996 = vmul.f32 %v990, %v995
        %s997 = scalar_lea.vmem [#allocation3], 8
        %998 = vst [vmem:[%s997] sm:$0xff] %v996
        %s999 = scalar_lea.vmem [#allocation2], 64
        %v1000 = vld [vmem:[%s999] sm:$0xff]
        %v1001 = vld [vmem:[%s999 + $0x8] sm:$0xff]
        %v1002 = vld [vmem:[%s999 + $0x10] sm:$0xff]
        %v1003 = vld [vmem:[%s999 + $0x18] sm:$0xff]
        %1004 = vmatprep.subr.mxu0 %v581
        %1005 = vmatpush1.msra.mxu0 %v580
        %1006 = vmatprep.subr.mxu0 %v585
        %1007 = vmatpush1.msra.mxu0 %v584
        %1008 = vmatprep.subr.mxu0 %v589
        %1009 = vmatpush1.msra.mxu0 %v588
        %1010 = vmatprep.subr.mxu0 %v593
        %1011 = vmatpush1.msra.mxu0 %v592
        %1012 = vmatprep.subr.mxu0 %v597
        %1013 = vmatpush1.msra.mxu0 %v596
        %1014 = vmatprep.subr.mxu0 %v601
        %1015 = vmatpush1.msra.mxu0 %v600
        %1016 = vmatprep.subr.mxu0 %v605
        %1017 = vmatpush1.msra.mxu0 %v604
        %1018 = vmatprep.subr.mxu0 %v609
        %1019 = vmatpush1.msra.mxu0 %v608
        %1020 = vmatprep.subr.mxu0 %v613
        %1021 = vmatpush1.msra.mxu0 %v612
        %1022 = vmatprep.subr.mxu0 %v617
        %1023 = vmatpush1.msra.mxu0 %v616
        %1024 = vmatprep.subr.mxu0 %v621
        %1025 = vmatpush1.msra.mxu0 %v620
        %1026 = vmatprep.subr.mxu0 %v625
        %1027 = vmatpush1.msra.mxu0 %v624
        %1028 = vmatprep.subr.mxu0 %v629
        %1029 = vmatpush1.msra.mxu0 %v628
        %1030 = vmatprep.subr.mxu0 %v633
        %1031 = vmatpush1.msra.mxu0 %v632
        %1032 = vmatprep.subr.mxu0 %v637
        %1033 = vmatpush1.msra.mxu0 %v636
        %1034 = vmatprep.subr.mxu0 %v641
        %1035 = vmatpush1.msra.mxu0 %v640
        %1036 = vmatprep.subr.mxu0 0.0
        %1037 = vmatpush1.msra.mxu0 0.0
        %1038 = vmatprep.subr.mxu0 0.0
        %1039 = vmatpush1.msra.mxu0 0.0
        %1040 = vmatprep.subr.mxu0 0.0
        %1041 = vmatpush1.msra.mxu0 0.0
        %1042 = vmatprep.subr.mxu0 0.0
        %1043 = vmatpush1.msra.mxu0 0.0
        %1044 = vmatprep.subr.mxu0 0.0
        %1045 = vmatpush1.msra.mxu0 0.0
        %1046 = vmatprep.subr.mxu0 0.0
        %1047 = vmatpush1.msra.mxu0 0.0
        %1048 = vmatprep.subr.mxu0 0.0
        %1049 = vmatpush1.msra.mxu0 0.0
        %1050 = vmatprep.subr.mxu0 0.0
        %1051 = vmatpush1.msra.mxu0 0.0
        %1052 = vmatprep.subr.mxu0 0.0
        %1053 = vmatpush1.msra.mxu0 0.0
        %1054 = vmatprep.subr.mxu0 0.0
        %1055 = vmatpush1.msra.mxu0 0.0
        %1056 = vmatprep.subr.mxu0 0.0
        %1057 = vmatpush1.msra.mxu0 0.0
        %1058 = vmatprep.subr.mxu0 0.0
        %1059 = vmatpush1.msra.mxu0 0.0
        %1060 = vmatprep.subr.mxu0 0.0
        %1061 = vmatpush1.msra.mxu0 0.0
        %1062 = vmatprep.subr.mxu0 0.0
        %1063 = vmatpush1.msra.mxu0 0.0
        %1064 = vmatprep.subr.mxu0 0.0
        %1065 = vmatpush1.msra.mxu0 0.0
        %1066 = vmatprep.subr.mxu0 0.0
        %1067 = vmatpush1.msra.mxu0 0.0
        %1068 = vmatprep.mubr.f32.mxu0 0.0
        %1069 = vmatmul.mubr.f32.gmra.mrb[0].mxu0 %v996
        %v1070 = vpop.f32.mrb[0].mxu0
        %v1071 = vadd.f32 0.0, %v1070
        %v1072 = vpop.f32.mrb[0].mxu0
        %v1073 = vadd.f32 0.0, %v1072
        %1074 = vdwg.mxu0
        %1075 = vmatprep.subr.mxu0 %v583
        %1076 = vmatpush1.msra.mxu0 %v582
        %1077 = vmatprep.subr.mxu0 %v587
        %1078 = vmatpush1.msra.mxu0 %v586
        %1079 = vmatprep.subr.mxu0 %v591
        %1080 = vmatpush1.msra.mxu0 %v590
        %1081 = vmatprep.subr.mxu0 %v595
        %1082 = vmatpush1.msra.mxu0 %v594
        %1083 = vmatprep.subr.mxu0 %v599
        %1084 = vmatpush1.msra.mxu0 %v598
        %1085 = vmatprep.subr.mxu0 %v603
        %1086 = vmatpush1.msra.mxu0 %v602
        %1087 = vmatprep.subr.mxu0 %v607
        %1088 = vmatpush1.msra.mxu0 %v606
        %1089 = vmatprep.subr.mxu0 %v611
        %1090 = vmatpush1.msra.mxu0 %v610
        %1091 = vmatprep.subr.mxu0 %v615
        %1092 = vmatpush1.msra.mxu0 %v614
        %1093 = vmatprep.subr.mxu0 %v619
        %1094 = vmatpush1.msra.mxu0 %v618
        %1095 = vmatprep.subr.mxu0 %v623
        %1096 = vmatpush1.msra.mxu0 %v622
        %1097 = vmatprep.subr.mxu0 %v627
        %1098 = vmatpush1.msra.mxu0 %v626
        %1099 = vmatprep.subr.mxu0 %v631
        %1100 = vmatpush1.msra.mxu0 %v630
        %1101 = vmatprep.subr.mxu0 %v635
        %1102 = vmatpush1.msra.mxu0 %v634
        %1103 = vmatprep.subr.mxu0 %v639
        %1104 = vmatpush1.msra.mxu0 %v638
        %1105 = vmatprep.subr.mxu0 %v643
        %1106 = vmatpush1.msra.mxu0 %v642
        %1107 = vmatprep.subr.mxu0 0.0
        %1108 = vmatpush1.msra.mxu0 0.0
        %1109 = vmatprep.subr.mxu0 0.0
        %1110 = vmatpush1.msra.mxu0 0.0
        %1111 = vmatprep.subr.mxu0 0.0
        %1112 = vmatpush1.msra.mxu0 0.0
        %1113 = vmatprep.subr.mxu0 0.0
        %1114 = vmatpush1.msra.mxu0 0.0
        %1115 = vmatprep.subr.mxu0 0.0
        %1116 = vmatpush1.msra.mxu0 0.0
        %1117 = vmatprep.subr.mxu0 0.0
        %1118 = vmatpush1.msra.mxu0 0.0
        %1119 = vmatprep.subr.mxu0 0.0
        %1120 = vmatpush1.msra.mxu0 0.0
        %1121 = vmatprep.subr.mxu0 0.0
        %1122 = vmatpush1.msra.mxu0 0.0
        %1123 = vmatprep.subr.mxu0 0.0
        %1124 = vmatpush1.msra.mxu0 0.0
        %1125 = vmatprep.subr.mxu0 0.0
        %1126 = vmatpush1.msra.mxu0 0.0
        %1127 = vmatprep.subr.mxu0 0.0
        %1128 = vmatpush1.msra.mxu0 0.0
        %1129 = vmatprep.subr.mxu0 0.0
        %1130 = vmatpush1.msra.mxu0 0.0
        %1131 = vmatprep.subr.mxu0 0.0
        %1132 = vmatpush1.msra.mxu0 0.0
        %1133 = vmatprep.subr.mxu0 0.0
        %1134 = vmatpush1.msra.mxu0 0.0
        %1135 = vmatprep.subr.mxu0 0.0
        %1136 = vmatpush1.msra.mxu0 0.0
        %1137 = vmatprep.subr.mxu0 0.0
        %1138 = vmatpush1.msra.mxu0 0.0
        %1139 = vmatprep.mubr.f32.mxu0 0.0
        %1140 = vmatmul.mubr.f32.gmra.mrb[0].mxu0 %v996
        %v1141 = vpop.f32.mrb[0].mxu0
        %v1142 = vadd.f32 0.0, %v1141
        %v1143 = vpop.f32.mrb[0].mxu0
        %v1144 = vadd.f32 0.0, %v1143
        %1145 = vdwg.mxu0
        %v1146 = vadd.f32 %v1000, %v1071
        %v1147 = vadd.f32 %v1001, %v1073
        %v1148 = vadd.f32 %v1002, %v1142
        %v1149 = vadd.f32 %v1003, %v1144
        %v1150 = vxor.u32 %v1146, 2147483648
        %v1151 = vxor.u32 %v1147, 2147483648
        %v1152 = vxor.u32 %v1148, 2147483648
        %v1153 = vmul.f32 %v1150, 1.442695
        %v1154 = vpow.pop %v1153
        %v1155 = vmul.f32 %v1151, 1.442695
        %v1156 = vpow.pop %v1155
        %v1157 = vmul.f32 %v1152, 1.442695
        %v1158 = vpow.pop %v1157
        %v1159 = vadd.f32 %v1154, 1.0
        %v1160 = vadd.f32 %v1156, 1.0
        %v1161 = vadd.f32 %v1158, 1.0
        %v1162 = vrcp.pop %v1159
        %v1163 = vmul.f32 1.0, %v1162
        %v1164 = vrcp.pop %v1160
        %v1165 = vmul.f32 1.0, %v1164
        %v1166 = vrcp.pop %v1161
        %v1167 = vmul.f32 1.0, %v1166
        %v1168 = vtanh.pop %v1149
        %v1169 = vmul.f32 %v1165, %v994
        %v1170 = vmul.f32 %v1163, %v1168
        %v1171 = vadd.f32 %v1169, %v1170
        %v1172 = vtanh.pop %v1171
        %v1173 = vmul.f32 %v1167, %v1172
        %s1174 = scalar_lea.vmem [#allocation3], 16
        %1175 = vst [vmem:[%s1174] sm:$0xff] %v1173
        %s1176 = scalar_lea.vmem [#allocation2], 96
        %v1177 = vld [vmem:[%s1176] sm:$0xff]
        %v1178 = vld [vmem:[%s1176 + $0x8] sm:$0xff]
        %v1179 = vld [vmem:[%s1176 + $0x10] sm:$0xff]
        %v1180 = vld [vmem:[%s1176 + $0x18] sm:$0xff]
        %1181 = vmatprep.subr.mxu0 %v581
        %1182 = vmatpush1.msra.mxu0 %v580
        %1183 = vmatprep.subr.mxu0 %v585
        %1184 = vmatpush1.msra.mxu0 %v584
        %1185 = vmatprep.subr.mxu0 %v589
        %1186 = vmatpush1.msra.mxu0 %v588
        %1187 = vmatprep.subr.mxu0 %v593
        %1188 = vmatpush1.msra.mxu0 %v592
        %1189 = vmatprep.subr.mxu0 %v597
        %1190 = vmatpush1.msra.mxu0 %v596
        %1191 = vmatprep.subr.mxu0 %v601
        %1192 = vmatpush1.msra.mxu0 %v600
        %1193 = vmatprep.subr.mxu0 %v605
        %1194 = vmatpush1.msra.mxu0 %v604
        %1195 = vmatprep.subr.mxu0 %v609
        %1196 = vmatpush1.msra.mxu0 %v608
        %1197 = vmatprep.subr.mxu0 %v613
        %1198 = vmatpush1.msra.mxu0 %v612
        %1199 = vmatprep.subr.mxu0 %v617
        %1200 = vmatpush1.msra.mxu0 %v616
        %1201 = vmatprep.subr.mxu0 %v621
        %1202 = vmatpush1.msra.mxu0 %v620
        %1203 = vmatprep.subr.mxu0 %v625
        %1204 = vmatpush1.msra.mxu0 %v624
        %1205 = vmatprep.subr.mxu0 %v629
        %1206 = vmatpush1.msra.mxu0 %v628
        %1207 = vmatprep.subr.mxu0 %v633
        %1208 = vmatpush1.msra.mxu0 %v632
        %1209 = vmatprep.subr.mxu0 %v637
        %1210 = vmatpush1.msra.mxu0 %v636
        %1211 = vmatprep.subr.mxu0 %v641
        %1212 = vmatpush1.msra.mxu0 %v640
        %1213 = vmatprep.subr.mxu0 0.0
        %1214 = vmatpush1.msra.mxu0 0.0
        %1215 = vmatprep.subr.mxu0 0.0
        %1216 = vmatpush1.msra.mxu0 0.0
        %1217 = vmatprep.subr.mxu0 0.0
        %1218 = vmatpush1.msra.mxu0 0.0
        %1219 = vmatprep.subr.mxu0 0.0
        %1220 = vmatpush1.msra.mxu0 0.0
        %1221 = vmatprep.subr.mxu0 0.0
        %1222 = vmatpush1.msra.mxu0 0.0
        %1223 = vmatprep.subr.mxu0 0.0
        %1224 = vmatpush1.msra.mxu0 0.0
        %1225 = vmatprep.subr.mxu0 0.0
        %1226 = vmatpush1.msra.mxu0 0.0
        %1227 = vmatprep.subr.mxu0 0.0
        %1228 = vmatpush1.msra.mxu0 0.0
        %1229 = vmatprep.subr.mxu0 0.0
        %1230 = vmatpush1.msra.mxu0 0.0
        %1231 = vmatprep.subr.mxu0 0.0
        %1232 = vmatpush1.msra.mxu0 0.0
        %1233 = vmatprep.subr.mxu0 0.0
        %1234 = vmatpush1.msra.mxu0 0.0
        %1235 = vmatprep.subr.mxu0 0.0
        %1236 = vmatpush1.msra.mxu0 0.0
        %1237 = vmatprep.subr.mxu0 0.0
        %1238 = vmatpush1.msra.mxu0 0.0
        %1239 = vmatprep.subr.mxu0 0.0
        %1240 = vmatpush1.msra.mxu0 0.0
        %1241 = vmatprep.subr.mxu0 0.0
        %1242 = vmatpush1.msra.mxu0 0.0
        %1243 = vmatprep.subr.mxu0 0.0
        %1244 = vmatpush1.msra.mxu0 0.0
        %1245 = vmatprep.mubr.f32.mxu0 0.0
        %1246 = vmatmul.mubr.f32.gmra.mrb[0].mxu0 %v1173
        %v1247 = vpop.f32.mrb[0].mxu0
        %v1248 = vadd.f32 0.0, %v1247
        %v1249 = vpop.f32.mrb[0].mxu0
        %v1250 = vadd.f32 0.0, %v1249
        %1251 = vdwg.mxu0
        %1252 = vmatprep.subr.mxu0 %v583
        %1253 = vmatpush1.msra.mxu0 %v582
        %1254 = vmatprep.subr.mxu0 %v587
        %1255 = vmatpush1.msra.mxu0 %v586
        %1256 = vmatprep.subr.mxu0 %v591
        %1257 = vmatpush1.msra.mxu0 %v590
        %1258 = vmatprep.subr.mxu0 %v595
        %1259 = vmatpush1.msra.mxu0 %v594
        %1260 = vmatprep.subr.mxu0 %v599
        %1261 = vmatpush1.msra.mxu0 %v598
        %1262 = vmatprep.subr.mxu0 %v603
        %1263 = vmatpush1.msra.mxu0 %v602
        %1264 = vmatprep.subr.mxu0 %v607
        %1265 = vmatpush1.msra.mxu0 %v606
        %1266 = vmatprep.subr.mxu0 %v611
        %1267 = vmatpush1.msra.mxu0 %v610
        %1268 = vmatprep.subr.mxu0 %v615
        %1269 = vmatpush1.msra.mxu0 %v614
        %1270 = vmatprep.subr.mxu0 %v619
        %1271 = vmatpush1.msra.mxu0 %v618
        %1272 = vmatprep.subr.mxu0 %v623
        %1273 = vmatpush1.msra.mxu0 %v622
        %1274 = vmatprep.subr.mxu0 %v627
        %1275 = vmatpush1.msra.mxu0 %v626
        %1276 = vmatprep.subr.mxu0 %v631
        %1277 = vmatpush1.msra.mxu0 %v630
        %1278 = vmatprep.subr.mxu0 %v635
        %1279 = vmatpush1.msra.mxu0 %v634
        %1280 = vmatprep.subr.mxu0 %v639
        %1281 = vmatpush1.msra.mxu0 %v638
        %1282 = vmatprep.subr.mxu0 %v643
        %1283 = vmatpush1.msra.mxu0 %v642
        %1284 = vmatprep.subr.mxu0 0.0
        %1285 = vmatpush1.msra.mxu0 0.0
        %1286 = vmatprep.subr.mxu0 0.0
        %1287 = vmatpush1.msra.mxu0 0.0
        %1288 = vmatprep.subr.mxu0 0.0
        %1289 = vmatpush1.msra.mxu0 0.0
        %1290 = vmatprep.subr.mxu0 0.0
        %1291 = vmatpush1.msra.mxu0 0.0
        %1292 = vmatprep.subr.mxu0 0.0
        %1293 = vmatpush1.msra.mxu0 0.0
        %1294 = vmatprep.subr.mxu0 0.0
        %1295 = vmatpush1.msra.mxu0 0.0
        %1296 = vmatprep.subr.mxu0 0.0
        %1297 = vmatpush1.msra.mxu0 0.0
        %1298 = vmatprep.subr.mxu0 0.0
        %1299 = vmatpush1.msra.mxu0 0.0
        %1300 = vmatprep.subr.mxu0 0.0
        %1301 = vmatpush1.msra.mxu0 0.0
        %1302 = vmatprep.subr.mxu0 0.0
        %1303 = vmatpush1.msra.mxu0 0.0
        %1304 = vmatprep.subr.mxu0 0.0
        %1305 = vmatpush1.msra.mxu0 0.0
        %1306 = vmatprep.subr.mxu0 0.0
        %1307 = vmatpush1.msra.mxu0 0.0
        %1308 = vmatprep.subr.mxu0 0.0
        %1309 = vmatpush1.msra.mxu0 0.0
        %1310 = vmatprep.subr.mxu0 0.0
        %1311 = vmatpush1.msra.mxu0 0.0
        %1312 = vmatprep.subr.mxu0 0.0
        %1313 = vmatpush1.msra.mxu0 0.0
        %1314 = vmatprep.subr.mxu0 0.0
        %1315 = vmatpush1.msra.mxu0 0.0
        %1316 = vmatprep.mubr.f32.mxu0 0.0
        %1317 = vmatmul.mubr.f32.gmra.mrb[0].mxu0 %v1173
        %v1318 = vpop.f32.mrb[0].mxu0
        %v1319 = vadd.f32 0.0, %v1318
        %v1320 = vpop.f32.mrb[0].mxu0
        %v1321 = vadd.f32 0.0, %v1320
        %1322 = vdwg.mxu0
        %v1323 = vadd.f32 %v1177, %v1248
        %v1324 = vadd.f32 %v1178, %v1250
        %v1325 = vadd.f32 %v1179, %v1319
        %v1326 = vadd.f32 %v1180, %v1321
        %v1327 = vxor.u32 %v1323, 2147483648
        %v1328 = vxor.u32 %v1324, 2147483648
        %v1329 = vxor.u32 %v1325, 2147483648
        %v1330 = vmul.f32 %v1327, 1.442695
        %v1331 = vpow.pop %v1330
        %v1332 = vmul.f32 %v1328, 1.442695
        %v1333 = vpow.pop %v1332
        %v1334 = vmul.f32 %v1329, 1.442695
        %v1335 = vpow.pop %v1334
        %v1336 = vadd.f32 %v1331, 1.0
        %v1337 = vadd.f32 %v1333, 1.0
        %v1338 = vadd.f32 %v1335, 1.0
        %v1339 = vrcp.pop %v1336
        %v1340 = vmul.f32 1.0, %v1339
        %v1341 = vrcp.pop %v1337
        %v1342 = vmul.f32 1.0, %v1341
        %v1343 = vrcp.pop %v1338
        %v1344 = vmul.f32 1.0, %v1343
        %v1345 = vtanh.pop %v1326
        %v1346 = vmul.f32 %v1342, %v1171
        %v1347 = vmul.f32 %v1340, %v1345
        %v1348 = vadd.f32 %v1346, %v1347
        %v1349 = vtanh.pop %v1348
        %v1350 = vmul.f32 %v1344, %v1349
        %s1351 = scalar_lea.vmem [#allocation3], 24
        %1352 = vst [vmem:[%s1351] sm:$0xff] %v1350
        %1353 = vst [vmem:[#allocation4] sm:$0xff] %v1350
        %1354 = vst [vmem:[%s645] sm:$0xff] %v1348
        %v1355 = vld [vmem:[#allocation3] sm:$0xff]
        %v1356 = vld [vmem:[#allocation3 + $0x8] sm:$0xff]
        %v1357 = vld [vmem:[#allocation3 + $0x10] sm:$0xff]
        %v1358 = vld [vmem:[#allocation3 + $0x18] sm:$0xff]
        %v1359 = vld [vmem:[#allocation11] sm:$0xff]
        %v1360 = vld [vmem:[#allocation11 + $0x8] sm:$0xff]
        %v1361 = vld [vmem:[#allocation11 + $0x10] sm:$0xff]
        %v1362 = vld [vmem:[#allocation11 + $0x18] sm:$0xff]
        %v1363 = vld [vmem:[#allocation11 + $0x20] sm:$0xff]
        %v1364 = vld [vmem:[#allocation11 + $0x28] sm:$0xff]
        %v1365 = vld [vmem:[#allocation11 + $0x30] sm:$0xff]
        %v1366 = vld [vmem:[#allocation11 + $0x38] sm:$0xff]
        %v1367 = vld [vmem:[#allocation11 + $0x40] sm:$0xff]
        %v1368 = vld [vmem:[#allocation11 + $0x48] sm:$0xff]
        %v1369 = vld [vmem:[#allocation11 + $0x50] sm:$0xff]
        %v1370 = vld [vmem:[#allocation11 + $0x58] sm:$0xff]
        %v1371 = vld [vmem:[#allocation11 + $0x60] sm:$0xff]
        %v1372 = vld [vmem:[#allocation11 + $0x68] sm:$0xff]
        %v1373 = vld [vmem:[#allocation11 + $0x70] sm:$0xff]
        %v1374 = vld [vmem:[#allocation11 + $0x78] sm:$0xff]
        %v1375 = vld [vmem:[%s5] sm:$0x1]
        %v1377 = vlaneseq
        %v1378 = vshrl.u32 %v1377, 7
        %v1379 = vsub.s32 0, %v1378
        %v1380 = vrot.slane %v1375, %v1379
        %1382 = vmatprep.subr.mxu0 0.0
        %1383 = vmatpush1.msra.mxu0 %v1359
        %1384 = vmatprep.subr.mxu0 0.0
        %1385 = vmatpush1.msra.mxu0 %v1360
        %1386 = vmatprep.subr.mxu0 0.0
        %1387 = vmatpush1.msra.mxu0 %v1361
        %1388 = vmatprep.subr.mxu0 0.0
        %1389 = vmatpush1.msra.mxu0 %v1362
        %1390 = vmatprep.subr.mxu0 0.0
        %1391 = vmatpush1.msra.mxu0 %v1363
        %1392 = vmatprep.subr.mxu0 0.0
        %1393 = vmatpush1.msra.mxu0 %v1364
        %1394 = vmatprep.subr.mxu0 0.0
        %1395 = vmatpush1.msra.mxu0 %v1365
        %1396 = vmatprep.subr.mxu0 0.0
        %1397 = vmatpush1.msra.mxu0 %v1366
        %1398 = vmatprep.subr.mxu0 0.0
        %1399 = vmatpush1.msra.mxu0 %v1367
        %1400 = vmatprep.subr.mxu0 0.0
        %1401 = vmatpush1.msra.mxu0 %v1368
        %1402 = vmatprep.subr.mxu0 0.0
        %1403 = vmatpush1.msra.mxu0 %v1369
        %1404 = vmatprep.subr.mxu0 0.0
        %1405 = vmatpush1.msra.mxu0 %v1370
        %1406 = vmatprep.subr.mxu0 0.0
        %1407 = vmatpush1.msra.mxu0 %v1371
        %1408 = vmatprep.subr.mxu0 0.0
        %1409 = vmatpush1.msra.mxu0 %v1372
        %1410 = vmatprep.subr.mxu0 0.0
        %1411 = vmatpush1.msra.mxu0 %v1373
        %1412 = vmatprep.subr.mxu0 0.0
        %1413 = vmatpush1.msra.mxu0 %v1374
        %1414 = vmatprep.subr.mxu0 0.0
        %1415 = vmatpush1.msra.mxu0 0.0
        %1416 = vmatprep.subr.mxu0 0.0
        %1417 = vmatpush1.msra.mxu0 0.0
        %1418 = vmatprep.subr.mxu0 0.0
        %1419 = vmatpush1.msra.mxu0 0.0
        %1420 = vmatprep.subr.mxu0 0.0
        %1421 = vmatpush1.msra.mxu0 0.0
        %1422 = vmatprep.subr.mxu0 0.0
        %1423 = vmatpush1.msra.mxu0 0.0
        %1424 = vmatprep.subr.mxu0 0.0
        %1425 = vmatpush1.msra.mxu0 0.0
        %1426 = vmatprep.subr.mxu0 0.0
        %1427 = vmatpush1.msra.mxu0 0.0
        %1428 = vmatprep.subr.mxu0 0.0
        %1429 = vmatpush1.msra.mxu0 0.0
        %1430 = vmatprep.subr.mxu0 0.0
        %1431 = vmatpush1.msra.mxu0 0.0
        %1432 = vmatprep.subr.mxu0 0.0
        %1433 = vmatpush1.msra.mxu0 0.0
        %1434 = vmatprep.subr.mxu0 0.0
        %1435 = vmatpush1.msra.mxu0 0.0
        %1436 = vmatprep.subr.mxu0 0.0
        %1437 = vmatpush1.msra.mxu0 0.0
        %1438 = vmatprep.subr.mxu0 0.0
        %1439 = vmatpush1.msra.mxu0 0.0
        %1440 = vmatprep.subr.mxu0 0.0
        %1441 = vmatpush1.msra.mxu0 0.0
        %1442 = vmatprep.subr.mxu0 0.0
        %1443 = vmatpush1.msra.mxu0 0.0
        %1444 = vmatprep.subr.mxu0 0.0
        %1445 = vmatpush1.msra.mxu0 0.0
        %1446 = vmatprep.mubr.f32.mxu0 0.0
        %1447 = vmatmul.mubr.f32.gmra.mrb[0].mxu0 %v1355
        %v1448 = vpop.f32.mrb[0].mxu0
        %v1449 = vadd.f32 %v1380, %v1448
        %v1450 = vpop.f32.mrb[0].mxu0
        %1451 = vmatprep.mubr.f32.mxu0 0.0
        %1452 = vmatmul.mubr.f32.gmra.mrb[0].mxu0 %v1356
        %v1453 = vpop.f32.mrb[0].mxu0
        %v1454 = vadd.f32 %v1380, %v1453
        %v1455 = vpop.f32.mrb[0].mxu0
        %1456 = vmatprep.mubr.f32.mxu0 0.0
        %1457 = vmatmul.mubr.f32.gmra.mrb[0].mxu0 %v1357
        %v1458 = vpop.f32.mrb[0].mxu0
        %v1459 = vadd.f32 %v1380, %v1458
        %v1460 = vpop.f32.mrb[0].mxu0
        %1461 = vmatprep.mubr.f32.mxu0 0.0
        %1462 = vmatmul.mubr.f32.gmra.mrb[0].mxu0 %v1358
        %v1463 = vpop.f32.mrb[0].mxu0
        %v1464 = vadd.f32 %v1380, %v1463
        %v1465 = vpop.f32.mrb[0].mxu0
        %1466 = vdwg.mxu0
        %1467 = vst [vmem:[%s330] sm:$0xff] %v1449
        %1468 = vst [vmem:[%s330 + $0x8] sm:$0xff] %v1454
        %1469 = vst [vmem:[%s330 + $0x10] sm:$0xff] %v1459
        %1470 = vst [vmem:[%s330 + $0x18] sm:$0xff] %v1464
        %s1471 = sand.u32 %s180, 1
        %s1472 = scalar_lea.sflag [#allocation7], %s1471
        %s1473 = sand.u32 %s180, 1
        %s1474 = smul.addr %s1473, 32
        %s1475 = scalar_lea.vmem [#allocation13], %s1474
        // Predicated region
        $region65: #{tpu_custom_call.1} parent=43 // pred_check
          %p1476 = pneg %p190
        $region66: #{tpu_custom_call.1} parent=43 // pred_check_branch
          %1478 = sbr.rel (%p1476) target = $region68
        $region67: #{tpu_custom_call.1} parent=43 // pred_region
          %s1479 = smul.u32 4, %s30
          %s1481 = ssub.s32 512, 512
          %1482 = vsyncadd %s1472, %s1481
          %s1483 = sadd.s32 %s29, %s1479
          %s1484 = smul.addr %s1483, 128
          %s1485 = scalar_lea.hbm %s6, %s1484
          %s1486 = sshll.u32 %s1475, 4
          %s1487 = int_to_ptr.vmem [resolvable:$true] %s1486
          %1492 = dma.vmem_to_hbm [thread:$0]  %s1487, 512, %s1485, %s1472, 128, 128, 8
        $region68: #{tpu_custom_call.1} parent=43 // pred_fallthru
          _
      $region44: #{tpu_custom_call.1} parent=5 // pred_fallthru
        _
      %p1493 = scmp.le.s32.totalorder 2, %s20
      // Predicated region
      $region69: #{tpu_custom_call.1} parent=5 // pred_check
        %p1494 = pneg %p1493
      $region70: #{tpu_custom_call.1} parent=5 // pred_check_branch
        %1496 = sbr.rel (%p1494) target = $region72
      $region71: #{tpu_custom_call.1} parent=5 // pred_region
        %s1497 = ssub.s32 %s20, 2
        // Predicated region
        $region73: #{tpu_custom_call.1} parent=71 // pred_check
          %p1498 = pneg %p196
        $region74: #{tpu_custom_call.1} parent=71 // pred_check_branch
          %1500 = sbr.rel (%p1498) target = $region76
        $region75: #{tpu_custom_call.1} parent=71 // pred_region
          %s1501 = sand.u32 %s181, 1
          %s1502 = scalar_lea.sflag [#allocation7], %s1501
          %s1503 = sand.u32 %s181, 1
          %s1504 = smul.addr %s1503, 32
          %s1505 = scalar_lea.vmem [#allocation13], %s1504
          %1506 = dma.done %s1502, 512
        $region76: #{tpu_custom_call.1} parent=71 // pred_fallthru
          _
      $region72: #{tpu_custom_call.1} parent=5 // pred_fallthru
        _
    $region6: #{tpu_custom_call.1} parent=1 // loop_footer
      %s24 = sadd.s32 1, %s20
    $region7: #{tpu_custom_call.1} parent=1 // loop_footer_branch
      %19 = sbr.rel target = $region3
    $region8: #{tpu_custom_call.1} parent=1 // loop_exit
      _
    %1507 = vsyncpa [#allocation6], 1
    %s1508 = scalar_lea.sflag [#allocation6], 1
    %1509 = vsyncpa %s1508, 1
    %1510 = vsyncpa [#allocation9], 1
    %1511 = vsyncpa [#allocation12], 1
    %1512 = vsyncpa [#allocation7], 1
    %s1513 = scalar_lea.sflag [#allocation7], 1
    %1514 = vsyncpa %s1513, 1

</llo_original>
